<compile_context>
chip_gen: v7x
topology: tpu7x:2x2x1
jax: 0.10.0
libtpu: 0.0.40
codegen_flags: <defaults>
</compile_context>

<pallas_src>
import jax
import jax.numpy as jnp
from jax import lax
from jax.experimental import pallas as pl
from jax.experimental.pallas import tpu as pltpu


def _round_up(a, b):
    return ((a + b - 1) // b) * b


def _linear_permute_kernel(x_ref, w_ref, b_ref, o_ref):
    # x_ref: (1, bm, Cin)   activation tile (row-major NHWC rows, M padded)
    # w_ref: (bc, Cin)      weight tile, untransposed (MXU contracts natively)
    # b_ref: (bc, 1)        bias tile, broadcast along the M (lane) axis
    # o_ref: (1, bc, bm)    output tile already in NCHW-flattened layout
    acc = lax.dot_general(
        w_ref[...], x_ref[0],
        dimension_numbers=(((1,), (1,)), ((), ())),   # contract over Cin
        preferred_element_type=jnp.float32,
    )
    o_ref[0] = (acc + b_ref[...]).astype(o_ref.dtype)


def linear_permute(x, weight, bias, *, block_m=512, block_cout=128):
    """x: (N, H, W, Cin); weight: (Cout, Cin); bias: (Cout,)
    Returns (N, Cout, H, W) == torch.permute(Linear(x), [0, 3, 1, 2])."""
    N, H, W, Cin = x.shape
    Cout = weight.shape[0]
    HW = H * W

    # ---- tile sizes -------------------------------------------------------
    # M: pad up to a multiple of 128 so output stores are lane-dense.
    bm = min(block_m, _round_up(HW, 128))
    M_pad = _round_up(HW, bm)
    # Cout: 128-row blocks when possible (exact MXU tiles on every gen).
    bc = block_cout if Cout % block_cout == 0 else Cout

    # ---- wrapper-side free / cheap reshapes -------------------------------
    x3 = x.reshape(N, HW, Cin)                       # contiguous reshape
    if M_pad != HW:
        x3 = jnp.pad(x3, ((0, 0), (0, M_pad - HW), (0, 0)))
    b2 = bias.reshape(Cout, 1)

    grid = (N, M_pad // bm, Cout // bc)

    y = pl.pallas_call(
        _linear_permute_kernel,
        out_shape=jax.ShapeDtypeStruct((N, Cout, M_pad), x.dtype),
        grid=grid,
        in_specs=[
            # x tile: independent of the Cout axis -> stays resident while
            # the (innermost) Cout axis sweeps.
            pl.BlockSpec((1, bm, Cin), lambda n, m, j: (n, m, 0)),
            # weight tile: streams per Cout block (pipelined DMA).
            pl.BlockSpec((bc, Cin), lambda n, m, j: (j, 0)),
            # bias tile.
            pl.BlockSpec((bc, 1), lambda n, m, j: (j, 0)),
        ],
        out_specs=pl.BlockSpec((1, bc, bm), lambda n, m, j: (n, j, m)),
        compiler_params=pltpu.CompilerParams(
            # All three axes are independent -> megacore sharding on v7x.
            dimension_semantics=("parallel", "parallel", "parallel")),
        cost_estimate=pl.CostEstimate(
            flops=2 * N * M_pad * Cin * Cout,
            transcendentals=0,
            bytes_accessed=4 * (N * M_pad * Cin + Cout * Cin + Cout
                                + N * Cout * M_pad)),
    )(x3, weight, b2)

    # (N, Cout, M_pad) -> drop pad -> (N, Cout, H, W): cheap slice + reshape.
    if M_pad != HW:
        y = y[:, :, :HW]
    return y.reshape(N, Cout, H, W)


if __name__ == "__main__":
    key = jax.random.PRNGKey(0)
    kx, kw, kb = jax.random.split(key, 3)

    # Shapes implied by the module: x178 (1, 14, 14, 1536), Linear(1536, 384).
    N, H, W, Cin, Cout = 1, 14, 14, 1536, 384

    bound = 1.0 / (Cin ** 0.5)
    x = jax.random.normal(kx, (N, H, W, Cin), dtype=jnp.float32)
    weight = jax.random.uniform(kw, (Cout, Cin), minval=-bound, maxval=bound,
                                dtype=jnp.float32)
    bias = jax.random.uniform(kb, (Cout,), minval=-bound, maxval=bound,
                              dtype=jnp.float32)

    out = linear_permute(x, weight, bias)
    jax.block_until_ready(out)

    # Reference: Linear then permute [0, 3, 1, 2].
    ref = jnp.transpose(jnp.einsum("nhwc,oc->nhwo", x, weight) + bias,
                        (0, 3, 1, 2))
    assert out.shape == (N, Cout, H, W), out.shape
    assert jnp.allclose(out, ref, atol=1e-4, rtol=1e-4)

    print("KERNEL_OK")
</pallas_src>

<mosaic_0001>
module attributes {stable_mosaic.version = 11 : i64} {
  func.func @_linear_permute_kernel(%arg0: i32, %arg1: i32, %arg2: i32, %arg3: memref<1x256x1536xf32, #tpu.memory_space<vmem>>, %arg4: memref<128x1536xf32, #tpu.memory_space<vmem>>, %arg5: memref<128x1xf32, #tpu.memory_space<vmem>>, %arg6: memref<1x128x256xf32, #tpu.memory_space<vmem>>) attributes {dimension_semantics = [#tpu.dimension_semantics<parallel>, #tpu.dimension_semantics<parallel>, #tpu.dimension_semantics<parallel>], iteration_bounds = array<i64: 1, 1, 3>, scalar_prefetch = 0 : i64, scratch_operands = 0 : i64, tpu.core_type = #tpu.core_type<tc>, window_params = [{transform_indices = @transform_0, window_bounds = array<i64: 1, 256, 1536>}, {transform_indices = @transform_1, window_bounds = array<i64: 128, 1536>}, {transform_indices = @transform_2, window_bounds = array<i64: 128, 1>}, {transform_indices = @transform_3, window_bounds = array<i64: 1, 128, 256>}]} {
    %c0 = arith.constant 0 : index
    %c0_0 = arith.constant 0 : index
    %0 = vector.load %arg4[%c0, %c0_0] : memref<128x1536xf32, #tpu.memory_space<vmem>>, vector<128x1536xf32>
    %c0_1 = arith.constant 0 : index
    %c0_2 = arith.constant 0 : index
    %c0_3 = arith.constant 0 : index
    %1 = vector.load %arg3[%c0_1, %c0_2, %c0_3] : memref<1x256x1536xf32, #tpu.memory_space<vmem>>, vector<1x256x1536xf32>
    %2 = vector.shape_cast %1 : vector<1x256x1536xf32> to vector<256x1536xf32>
    %cst = arith.constant dense<0.000000e+00> : vector<128x256xf32>
    %3 = tpu.matmul %0, %2, %cst {dimension_numbers = #tpu.dot_dimension_numbers<[1], [1], [0], [0], [0, 0, 1, 0], [], []>} : vector<128x1536xf32>, vector<256x1536xf32>, vector<128x256xf32> -> vector<128x256xf32>
    %c0_4 = arith.constant 0 : index
    %c0_5 = arith.constant 0 : index
    %4 = vector.load %arg5[%c0_4, %c0_5] : memref<128x1xf32, #tpu.memory_space<vmem>>, vector<128x1xf32>
    %5 = vector.broadcast %4 : vector<128x1xf32> to vector<128x256xf32>
    %6 = arith.addf %3, %5 : vector<128x256xf32>
    %c0_6 = arith.constant 0 : index
    %c0_7 = arith.constant 0 : index
    %c0_8 = arith.constant 0 : index
    %7 = vector.load %arg6[%c0_6, %c0_7, %c0_8] : memref<1x128x256xf32, #tpu.memory_space<vmem>>, vector<1x128x256xf32>
    %8 = vector.shape_cast %7 : vector<1x128x256xf32> to vector<128x256xf32>
    %9 = vector.shape_cast %6 : vector<128x256xf32> to vector<1x128x256xf32>
    tpu.vector_store %arg6[%c0_6, %c0_7, %c0_8], %9 {strides = array<i32>} : memref<1x128x256xf32, #tpu.memory_space<vmem>>, vector<1x128x256xf32>,
    return
  }
  func.func @transform_0(%arg0: i32, %arg1: i32, %arg2: i32) -> (i32, i32, i32) {
    %c0_i32 = arith.constant 0 : i32
    %c0_i32_0 = arith.constant 0 : i32
    return %arg0, %arg1, %c0_i32 : i32, i32, i32
  }
  func.func @transform_1(%arg0: i32, %arg1: i32, %arg2: i32) -> (i32, i32) {
    %c0_i32 = arith.constant 0 : i32
    %c0_i32_0 = arith.constant 0 : i32
    return %arg2, %c0_i32 : i32, i32
  }
  func.func @transform_2(%arg0: i32, %arg1: i32, %arg2: i32) -> (i32, i32) {
    %c0_i32 = arith.constant 0 : i32
    %c0_i32_0 = arith.constant 0 : i32
    return %arg2, %c0_i32 : i32, i32
  }
  func.func @transform_3(%arg0: i32, %arg1: i32, %arg2: i32) -> (i32, i32, i32) {
    %c0_i32 = arith.constant 0 : i32
    return %arg0, %arg2, %arg1 : i32, i32, i32
  }
}

</mosaic_0001>

<llo_original>
// kernel: tpu_custom_call.1
$region0: #{tpu_custom_call.1}
  #allocation0 [shape = 'u32[]', space=smem, size = 0x4, offset = 0x4, fixed_abs, tag = 'smem constant byte address 0x4 - core index']
  #allocation1 [shape = 'u32[144,128]{1,0:T(1,128)}', space=vmem, size = 0x12000, scoped, tag = 'internal scratch']
  %s0 = inlined_call_operand.hbm [shape: f32[1,256,1536], index: 0, kind: input, shape index: {}]
  %s1 = inlined_call_operand.hbm [shape: f32[384,1536], index: 1, kind: input, shape index: {}]
  %s2 = inlined_call_operand.vmem [shape: f32[384,1], index: 2, kind: input, shape index: {}]
  %s3 = inlined_call_operand.hbm [shape: f32[1,384,256], index: 3, kind: output, shape index: {}]
  %s4 = sld [smem:[#allocation0]]
  $region53: #{tpu_custom_call.1} parent=0
    _
  %s6 = ssub.s32 1, %s4
  %s7 = scalar_select 0, %s6, %s4
  $region1: #{tpu_custom_call.1} parent=0
    #allocation2 [shape = 'u8[1572864]{0}', space=vmem, size = 0x180000, scoped, tag = 'input window, operand 0, single buffered']
    #allocation3 [shape = 's32[2]{0}', space=sflag, size = 0x8, scoped, tag = 'scoped memory for tpu_custom_call.1']
    #allocation4 [shape = 's32[2]{0}', space=sflag, size = 0x8, scoped, tag = 'scoped memory for tpu_custom_call.1']
    #allocation5 [shape = 'u8[1572864]{0}', space=vmem, size = 0x180000, scoped, tag = 'input window, operand 1']
    #allocation6 [shape = 's32[2]{0}', space=sflag, size = 0x8, scoped, tag = 'scoped memory for tpu_custom_call.1']
    #allocation7 [shape = 'u8[262144]{0}', space=vmem, size = 0x40000, scoped, tag = 'output window, operand 0']
    %8 = vsyncpa [#allocation3], 0
    %9 = vsyncpa [#allocation6], 0
    %s10 = scalar_lea.sflag [#allocation6], 1
    %11 = vsyncpa %s10, 0
    %12 = vsyncpa [#allocation4], 0
    %s13 = scalar_lea.sflag [#allocation4], 1
    %14 = vsyncpa %s13, 0
    loop: start=0, step=1, limit=5
    $region2: #{tpu_custom_call.1} parent=1 // loop_pre_header
      _
    $region3: #{tpu_custom_call.1} parent=1 // loop_header
      %s16 = sphi 0, %s20
      %p17 = scmp.ge.s32.totalorder %s16, 5
      %s23 = sphi 0, %s42
      %s24 = sphi 0, %s38
      %s25 = sphi 0, %s34
      %s26 = sphi 0, %s23
      %s27 = sphi 0, %s24
      %s28 = sphi 0, %s25
      %s29 = sphi 0, %s26
      %s30 = sphi 0, %s27
      %s31 = sphi 0, %s28
      %s47 = sphi 0, %s49
      %s50 = sphi 0, %s47
      %s51 = sphi 0, %s50
      %s67 = sphi 0, %s51
      %s73 = sphi 0, %s75
      %s76 = sphi 0, %s73
      %s77 = sphi 0, %s76
      %s93 = sphi 0, %s77
      %s99 = sphi 0, %s101
      %s102 = sphi 0, %s99
      %s103 = sphi 0, %s102
      %s119 = sphi 0, %s103
      %s129 = sphi 0, %s131
      %s132 = sphi 0, %s129
      %s133 = sphi 0, %s132
      %s149 = sphi 0, %s133
    $region4: #{tpu_custom_call.1} parent=1 // loop_header_branch
      %19 = sbr.rel (%p17) target = $region8
    $region5: #{tpu_custom_call.1} parent=1 // loop_body
      %s21 = ssub.s32 %s16, 1
      %s22 = ssub.s32 %s16, 2
      %s32 = sadd.s32 1, %s25
      %p33 = scmp.ge.s32.totalorder %s32, 3
      %s34 = scalar_select %p33, 0, %s32
      %s35 = sadd.s32 1, %s24
      %s36 = scalar_select %p33, %s35, %s24
      %p37 = scmp.ge.s32.totalorder %s36, 1
      %s38 = scalar_select %p37, 0, %s36
      %s39 = sadd.s32 1, %s23
      %s40 = scalar_select %p37, %s39, %s23
      %p41 = scmp.ge.s32.totalorder %s40, 1
      %s42 = scalar_select %p41, 0, %s40
      %s43 = ssub.s32 %s23, %s42
      %s44 = ssub.s32 %s24, %s38
      %s45 = sor.u32 %s43, %s44
      %p46 = scmp.eq.s32.totalorder %s45, 0
      %s48 = sadd.s32 %s47, 1
      %s49 = scalar_select %p46, %s47, %s48
      %p52 = pneg %p46
      %p53 = scmp.eq.s32.totalorder %s16, 2
      %p54 = por %p52, %p53
      %p55 = scmp.ne.s32.totalorder %s47, %s50
      %p56 = scmp.eq.s32.totalorder %s16, 0
      %p57 = por %p55, %p56
      %p58 = scmp.ne.s32.totalorder %s47, %s50
      %p59 = scmp.eq.s32.totalorder %s21, 2
      %p60 = por %p58, %p59
      %p61 = scmp.ne.s32.totalorder %s50, %s51
      %p62 = scmp.eq.s32.totalorder %s21, 0
      %p63 = por %p61, %p62
      %p64 = scmp.ne.s32.totalorder %s50, %s51
      %p65 = scmp.eq.s32.totalorder %s22, 2
      %p66 = por %p64, %p65
      %p68 = scmp.ne.s32.totalorder %s51, %s67
      %p69 = scmp.eq.s32.totalorder %s22, 0
      %p70 = por %p68, %p69
      %s71 = ssub.s32 %s25, %s34
      %p72 = scmp.eq.s32.totalorder %s71, 0
      %s74 = sadd.s32 %s73, 1
      %s75 = scalar_select %p72, %s73, %s74
      %p78 = pneg %p72
      %p79 = scmp.eq.s32.totalorder %s16, 2
      %p80 = por %p78, %p79
      %p81 = scmp.ne.s32.totalorder %s73, %s76
      %p82 = scmp.eq.s32.totalorder %s16, 0
      %p83 = por %p81, %p82
      %p84 = scmp.ne.s32.totalorder %s73, %s76
      %p85 = scmp.eq.s32.totalorder %s21, 2
      %p86 = por %p84, %p85
      %p87 = scmp.ne.s32.totalorder %s76, %s77
      %p88 = scmp.eq.s32.totalorder %s21, 0
      %p89 = por %p87, %p88
      %p90 = scmp.ne.s32.totalorder %s76, %s77
      %p91 = scmp.eq.s32.totalorder %s22, 2
      %p92 = por %p90, %p91
      %p94 = scmp.ne.s32.totalorder %s77, %s93
      %p95 = scmp.eq.s32.totalorder %s22, 0
      %p96 = por %p94, %p95
      %s97 = ssub.s32 %s25, %s34
      %p98 = scmp.eq.s32.totalorder %s97, 0
      %s100 = sadd.s32 %s99, 1
      %s101 = scalar_select %p98, %s99, %s100
      %p104 = pneg %p98
      %p105 = scmp.eq.s32.totalorder %s16, 2
      %p106 = por %p104, %p105
      %p107 = scmp.ne.s32.totalorder %s99, %s102
      %p108 = scmp.eq.s32.totalorder %s16, 0
      %p109 = por %p107, %p108
      %p110 = scmp.ne.s32.totalorder %s99, %s102
      %p111 = scmp.eq.s32.totalorder %s21, 2
      %p112 = por %p110, %p111
      %p113 = scmp.ne.s32.totalorder %s102, %s103
      %p114 = scmp.eq.s32.totalorder %s21, 0
      %p115 = por %p113, %p114
      %p116 = scmp.ne.s32.totalorder %s102, %s103
      %p117 = scmp.eq.s32.totalorder %s22, 2
      %p118 = por %p116, %p117
      %p120 = scmp.ne.s32.totalorder %s103, %s119
      %p121 = scmp.eq.s32.totalorder %s22, 0
      %p122 = por %p120, %p121
      %s123 = ssub.s32 %s23, %s42
      %s124 = ssub.s32 %s25, %s34
      %s125 = sor.u32 %s123, %s124
      %s126 = ssub.s32 %s24, %s38
      %s127 = sor.u32 %s125, %s126
      %p128 = scmp.eq.s32.totalorder %s127, 0
      %s130 = sadd.s32 %s129, 1
      %s131 = scalar_select %p128, %s129, %s130
      %p134 = pneg %p128
      %p135 = scmp.eq.s32.totalorder %s16, 2
      %p136 = por %p134, %p135
      %p137 = scmp.ne.s32.totalorder %s129, %s132
      %p138 = scmp.eq.s32.totalorder %s16, 0
      %p139 = por %p137, %p138
      %p140 = scmp.ne.s32.totalorder %s129, %s132
      %p141 = scmp.eq.s32.totalorder %s21, 2
      %p142 = por %p140, %p141
      %p143 = scmp.ne.s32.totalorder %s132, %s133
      %p144 = scmp.eq.s32.totalorder %s21, 0
      %p145 = por %p143, %p144
      %p146 = scmp.ne.s32.totalorder %s132, %s133
      %p147 = scmp.eq.s32.totalorder %s22, 2
      %p148 = por %p146, %p147
      %p150 = scmp.ne.s32.totalorder %s133, %s149
      %p151 = scmp.eq.s32.totalorder %s22, 0
      %p152 = por %p150, %p151
      %p153 = scmp.le.s32.totalorder 1, %s16
      %p154 = scmp.lt.s32.totalorder %s16, 4
      %p155 = pnand %p153, %p154
      %p156 = pneg %p155
      // Predicated region
      $region9: #{tpu_custom_call.1} parent=5 // pred_check
        _
      $region10: #{tpu_custom_call.1} parent=5 // pred_check_branch
        %158 = sbr.rel (%p155) target = $region12
      $region11: #{tpu_custom_call.1} parent=5 // pred_region
        %s159 = ssub.s32 %s16, 1
        // Predicated region
        $region13: #{tpu_custom_call.1} parent=11 // pred_check
          %p160 = pneg %p63
        $region14: #{tpu_custom_call.1} parent=11 // pred_check_branch
          %162 = sbr.rel (%p160) target = $region16
        $region15: #{tpu_custom_call.1} parent=11 // pred_region
          %s163 = smul.u32 32, %s27
          %s165 = ssub.s32 49152, 49152
          %166 = vsyncadd [#allocation3], %s165
          %s167 = smul.addr %s163, 12
          %s168 = smul.addr %s26, 384
          %s169 = sadd.s32 %s167, %s168
          %s170 = smul.addr %s169, 128
          %s171 = scalar_lea.hbm %s0, %s170
          %s172 = sshll.u32 [#allocation2], 4
          %s173 = int_to_ptr.vmem [resolvable:$true] %s172
          %178 = dma.hbm_to_vmem [thread:$0]  %s171, 49152, %s173, [#allocation3], 1536, 1536, 96
        $region16: #{tpu_custom_call.1} parent=11 // pred_fallthru
          _
      $region12: #{tpu_custom_call.1} parent=5 // pred_fallthru
        _
      %p179 = scmp.lt.s32.totalorder %s16, 3
      // Predicated region
      $region17: #{tpu_custom_call.1} parent=5 // pred_check
        %p180 = pneg %p179
      $region18: #{tpu_custom_call.1} parent=5 // pred_check_branch
        %182 = sbr.rel (%p180) target = $region20
      $region19: #{tpu_custom_call.1} parent=5 // pred_region
        // Predicated region
        $region21: #{tpu_custom_call.1} parent=19 // pred_check
          %p183 = pneg %p83
        $region22: #{tpu_custom_call.1} parent=19 // pred_check_branch
          %185 = sbr.rel (%p183) target = $region24
        $region23: #{tpu_custom_call.1} parent=19 // pred_region
          %s186 = sand.u32 %s73, 1
          %s187 = scalar_lea.sflag [#allocation6], %s186
          %s188 = sand.u32 %s73, 1
          %s189 = smul.addr %s188, 1536
          %s190 = scalar_lea.vmem [#allocation5], %s189
          %s191 = smul.u32 16, %s25
          %s193 = ssub.s32 24576, 24576
          %194 = vsyncadd %s187, %s193
          %s195 = smul.addr %s191, 12
          %s196 = smul.addr %s195, 128
          %s197 = scalar_lea.hbm %s1, %s196
          %s198 = sshll.u32 %s190, 4
          %s199 = int_to_ptr.vmem [resolvable:$true] %s198
          %204 = dma.hbm_to_vmem [thread:$0]  %s197, 24576, %s199, %s187, 1536, 1536, 96
        $region24: #{tpu_custom_call.1} parent=19 // pred_fallthru
          _
        // Predicated region
        $region25: #{tpu_custom_call.1} parent=19 // pred_check
          %p205 = pneg %p109
        $region26: #{tpu_custom_call.1} parent=19 // pred_check_branch
          %207 = sbr.rel (%p205) target = $region28
        $region27: #{tpu_custom_call.1} parent=19 // pred_region
          %s208 = smul.u32 16, %s25
          %p209 = scmp.lt.s32.totalorder %s208, 47
          %s210 = scalar_select %p209, %s208, 47
          %s211 = smul.addr %s210, 8
          %s212 = scalar_lea.vmem %s2, %s211
          %s213 = smul.u32 16, %s25
        $region28: #{tpu_custom_call.1} parent=19 // pred_fallthru
          _
      $region20: #{tpu_custom_call.1} parent=5 // pred_fallthru
        _
      %p214 = scmp.le.s32.totalorder 1, %s16
      %p215 = scmp.lt.s32.totalorder %s16, 4
      %p216 = pnand %p214, %p215
      %p217 = pneg %p216
      // Predicated region
      $region29: #{tpu_custom_call.1} parent=5 // pred_check
        _
      $region30: #{tpu_custom_call.1} parent=5 // pred_check_branch
        %219 = sbr.rel (%p216) target = $region32
      $region31: #{tpu_custom_call.1} parent=5 // pred_region
        %s220 = ssub.s32 %s16, 1
        // Predicated region
        $region33: #{tpu_custom_call.1} parent=31 // pred_check
          %p221 = pneg %p63
        $region34: #{tpu_custom_call.1} parent=31 // pred_check_branch
          %223 = sbr.rel (%p221) target = $region36
        $region35: #{tpu_custom_call.1} parent=31 // pred_region
          %224 = dma.done [#allocation3], 49152
        $region36: #{tpu_custom_call.1} parent=31 // pred_fallthru
          _
        %s225 = sand.u32 %s76, 1
        %s226 = scalar_lea.sflag [#allocation6], %s225
        %s227 = sand.u32 %s76, 1
        %s228 = smul.addr %s227, 1536
        %s229 = scalar_lea.vmem [#allocation5], %s228
        // Predicated region
        $region37: #{tpu_custom_call.1} parent=31 // pred_check
          %p230 = pneg %p89
        $region38: #{tpu_custom_call.1} parent=31 // pred_check_branch
          %232 = sbr.rel (%p230) target = $region40
        $region39: #{tpu_custom_call.1} parent=31 // pred_region
          %233 = dma.done %s226, 24576
        $region40: #{tpu_custom_call.1} parent=31 // pred_fallthru
          _
        %p234 = pneg %p63
        %p235 = pneg %p60
        %s236 = sand.u32 %s76, 1
        %s237 = scalar_lea.sflag [#allocation6], %s236
        %s238 = sand.u32 %s76, 1
        %s239 = smul.addr %s238, 1536
        %s240 = scalar_lea.vmem [#allocation5], %s239
        %p241 = pneg %p89
        %p242 = pneg %p86
        %s243 = smul.u32 16, %s28
        %p244 = scmp.lt.s32.totalorder %s243, 47
        %s245 = scalar_select %p244, %s243, 47
        %s246 = smul.addr %s245, 8
        %s247 = scalar_lea.vmem %s2, %s246
        %p248 = pneg %p115
        %p249 = pneg %p112
        %p250 = pneg %p145
        %p251 = pneg %p142
        %s252 = sand.u32 %s132, 1
        %s253 = scalar_lea.sflag [#allocation4], %s252
        %s254 = sand.u32 %s132, 1
        %s255 = smul.addr %s254, 256
        %s256 = scalar_lea.vmem [#allocation7], %s255
        %s257 = smul.u32 32, %s27
        %s258 = smul.u32 16, %s28
        %s259 = smul.u32 16, %s28
        %p260 = scmp.lt.s32.totalorder %s259, 47
        %s261 = scalar_select %p260, %s259, 47
        %s262 = smul.addr %s261, 8
        %s263 = scalar_lea.vmem %s2, %s262
        %s264 = smul.u32 16, %s28
        %s265 = smul.u32 16, %s28
        %s266 = smul.u32 2, %s27
        %v267 = vld [vmem:[%s229] sm:$0xff]
        %v268 = vld [vmem:[%s229 + $0x8] sm:$0xff]
        %v269 = vld [vmem:[%s229 + $0x10] sm:$0xff]
        %v270 = vld [vmem:[%s229 + $0x18] sm:$0xff]
        %v271 = vld [vmem:[%s229 + $0x20] sm:$0xff]
        %v272 = vld [vmem:[%s229 + $0x28] sm:$0xff]
        %v273 = vld [vmem:[%s229 + $0x30] sm:$0xff]
        %v274 = vld [vmem:[%s229 + $0x38] sm:$0xff]
        %v275 = vld [vmem:[%s229 + $0x40] sm:$0xff]
        %v276 = vld [vmem:[%s229 + $0x48] sm:$0xff]
        %v277 = vld [vmem:[%s229 + $0x50] sm:$0xff]
        %v278 = vld [vmem:[%s229 + $0x58] sm:$0xff]
        %v279 = vld [vmem:[%s229 + $0x60] sm:$0xff]
        %v280 = vld [vmem:[%s229 + $0x68] sm:$0xff]
        %v281 = vld [vmem:[%s229 + $0x70] sm:$0xff]
        %v282 = vld [vmem:[%s229 + $0x78] sm:$0xff]
        %v283 = vld [vmem:[%s229 + $0x80] sm:$0xff]
        %v284 = vld [vmem:[%s229 + $0x88] sm:$0xff]
        %v285 = vld [vmem:[%s229 + $0x90] sm:$0xff]
        %v286 = vld [vmem:[%s229 + $0x98] sm:$0xff]
        %v287 = vld [vmem:[%s229 + $0xa0] sm:$0xff]
        %v288 = vld [vmem:[%s229 + $0xa8] sm:$0xff]
        %v289 = vld [vmem:[%s229 + $0xb0] sm:$0xff]
        %v290 = vld [vmem:[%s229 + $0xb8] sm:$0xff]
        %v291 = vld [vmem:[%s229 + $0xc0] sm:$0xff]
        %v292 = vld [vmem:[%s229 + $0xc8] sm:$0xff]
        %v293 = vld [vmem:[%s229 + $0xd0] sm:$0xff]
        %v294 = vld [vmem:[%s229 + $0xd8] sm:$0xff]
        %v295 = vld [vmem:[%s229 + $0xe0] sm:$0xff]
        %v296 = vld [vmem:[%s229 + $0xe8] sm:$0xff]
        %v297 = vld [vmem:[%s229 + $0xf0] sm:$0xff]
        %v298 = vld [vmem:[%s229 + $0xf8] sm:$0xff]
        %v299 = vld [vmem:[%s229 + $0x100] sm:$0xff]
        %v300 = vld [vmem:[%s229 + $0x108] sm:$0xff]
        %v301 = vld [vmem:[%s229 + $0x110] sm:$0xff]
        %v302 = vld [vmem:[%s229 + $0x118] sm:$0xff]
        %v303 = vld [vmem:[%s229 + $0x120] sm:$0xff]
        %v304 = vld [vmem:[%s229 + $0x128] sm:$0xff]
        %v305 = vld [vmem:[%s229 + $0x130] sm:$0xff]
        %v306 = vld [vmem:[%s229 + $0x138] sm:$0xff]
        %v307 = vld [vmem:[%s229 + $0x140] sm:$0xff]
        %v308 = vld [vmem:[%s229 + $0x148] sm:$0xff]
        %v309 = vld [vmem:[%s229 + $0x150] sm:$0xff]
        %v310 = vld [vmem:[%s229 + $0x158] sm:$0xff]
        %v311 = vld [vmem:[%s229 + $0x160] sm:$0xff]
        %v312 = vld [vmem:[%s229 + $0x168] sm:$0xff]
        %v313 = vld [vmem:[%s229 + $0x170] sm:$0xff]
        %v314 = vld [vmem:[%s229 + $0x178] sm:$0xff]
        %v315 = vld [vmem:[%s229 + $0x180] sm:$0xff]
        %v316 = vld [vmem:[%s229 + $0x188] sm:$0xff]
        %v317 = vld [vmem:[%s229 + $0x190] sm:$0xff]
        %v318 = vld [vmem:[%s229 + $0x198] sm:$0xff]
        %v319 = vld [vmem:[%s229 + $0x1a0] sm:$0xff]
        %v320 = vld [vmem:[%s229 + $0x1a8] sm:$0xff]
        %v321 = vld [vmem:[%s229 + $0x1b0] sm:$0xff]
        %v322 = vld [vmem:[%s229 + $0x1b8] sm:$0xff]
        %v323 = vld [vmem:[%s229 + $0x1c0] sm:$0xff]
        %v324 = vld [vmem:[%s229 + $0x1c8] sm:$0xff]
        %v325 = vld [vmem:[%s229 + $0x1d0] sm:$0xff]
        %v326 = vld [vmem:[%s229 + $0x1d8] sm:$0xff]
        %v327 = vld [vmem:[%s229 + $0x1e0] sm:$0xff]
        %v328 = vld [vmem:[%s229 + $0x1e8] sm:$0xff]
        %v329 = vld [vmem:[%s229 + $0x1f0] sm:$0xff]
        %v330 = vld [vmem:[%s229 + $0x1f8] sm:$0xff]
        %v331 = vld [vmem:[%s229 + $0x200] sm:$0xff]
        %v332 = vld [vmem:[%s229 + $0x208] sm:$0xff]
        %v333 = vld [vmem:[%s229 + $0x210] sm:$0xff]
        %v334 = vld [vmem:[%s229 + $0x218] sm:$0xff]
        %v335 = vld [vmem:[%s229 + $0x220] sm:$0xff]
        %v336 = vld [vmem:[%s229 + $0x228] sm:$0xff]
        %v337 = vld [vmem:[%s229 + $0x230] sm:$0xff]
        %v338 = vld [vmem:[%s229 + $0x238] sm:$0xff]
        %v339 = vld [vmem:[%s229 + $0x240] sm:$0xff]
        %v340 = vld [vmem:[%s229 + $0x248] sm:$0xff]
        %v341 = vld [vmem:[%s229 + $0x250] sm:$0xff]
        %v342 = vld [vmem:[%s229 + $0x258] sm:$0xff]
        %v343 = vld [vmem:[%s229 + $0x260] sm:$0xff]
        %v344 = vld [vmem:[%s229 + $0x268] sm:$0xff]
        %v345 = vld [vmem:[%s229 + $0x270] sm:$0xff]
        %v346 = vld [vmem:[%s229 + $0x278] sm:$0xff]
        %v347 = vld [vmem:[%s229 + $0x280] sm:$0xff]
        %v348 = vld [vmem:[%s229 + $0x288] sm:$0xff]
        %v349 = vld [vmem:[%s229 + $0x290] sm:$0xff]
        %v350 = vld [vmem:[%s229 + $0x298] sm:$0xff]
        %v351 = vld [vmem:[%s229 + $0x2a0] sm:$0xff]
        %v352 = vld [vmem:[%s229 + $0x2a8] sm:$0xff]
        %v353 = vld [vmem:[%s229 + $0x2b0] sm:$0xff]
        %v354 = vld [vmem:[%s229 + $0x2b8] sm:$0xff]
        %v355 = vld [vmem:[%s229 + $0x2c0] sm:$0xff]
        %v356 = vld [vmem:[%s229 + $0x2c8] sm:$0xff]
        %v357 = vld [vmem:[%s229 + $0x2d0] sm:$0xff]
        %v358 = vld [vmem:[%s229 + $0x2d8] sm:$0xff]
        %v359 = vld [vmem:[%s229 + $0x2e0] sm:$0xff]
        %v360 = vld [vmem:[%s229 + $0x2e8] sm:$0xff]
        %v361 = vld [vmem:[%s229 + $0x2f0] sm:$0xff]
        %v362 = vld [vmem:[%s229 + $0x2f8] sm:$0xff]
        %v363 = vld [vmem:[%s229 + $0x300] sm:$0xff]
        %v364 = vld [vmem:[%s229 + $0x308] sm:$0xff]
        %v365 = vld [vmem:[%s229 + $0x310] sm:$0xff]
        %v366 = vld [vmem:[%s229 + $0x318] sm:$0xff]
        %v367 = vld [vmem:[%s229 + $0x320] sm:$0xff]
        %v368 = vld [vmem:[%s229 + $0x328] sm:$0xff]
        %v369 = vld [vmem:[%s229 + $0x330] sm:$0xff]
        %v370 = vld [vmem:[%s229 + $0x338] sm:$0xff]
        %v371 = vld [vmem:[%s229 + $0x340] sm:$0xff]
        %v372 = vld [vmem:[%s229 + $0x348] sm:$0xff]
        %v373 = vld [vmem:[%s229 + $0x350] sm:$0xff]
        %v374 = vld [vmem:[%s229 + $0x358] sm:$0xff]
        %v375 = vld [vmem:[%s229 + $0x360] sm:$0xff]
        %v376 = vld [vmem:[%s229 + $0x368] sm:$0xff]
        %v377 = vld [vmem:[%s229 + $0x370] sm:$0xff]
        %v378 = vld [vmem:[%s229 + $0x378] sm:$0xff]
        %v379 = vld [vmem:[%s229 + $0x380] sm:$0xff]
        %v380 = vld [vmem:[%s229 + $0x388] sm:$0xff]
        %v381 = vld [vmem:[%s229 + $0x390] sm:$0xff]
        %v382 = vld [vmem:[%s229 + $0x398] sm:$0xff]
        %v383 = vld [vmem:[%s229 + $0x3a0] sm:$0xff]
        %v384 = vld [vmem:[%s229 + $0x3a8] sm:$0xff]
        %v385 = vld [vmem:[%s229 + $0x3b0] sm:$0xff]
        %v386 = vld [vmem:[%s229 + $0x3b8] sm:$0xff]
        %v387 = vld [vmem:[%s229 + $0x3c0] sm:$0xff]
        %v388 = vld [vmem:[%s229 + $0x3c8] sm:$0xff]
        %v389 = vld [vmem:[%s229 + $0x3d0] sm:$0xff]
        %v390 = vld [vmem:[%s229 + $0x3d8] sm:$0xff]
        %v391 = vld [vmem:[%s229 + $0x3e0] sm:$0xff]
        %v392 = vld [vmem:[%s229 + $0x3e8] sm:$0xff]
        %v393 = vld [vmem:[%s229 + $0x3f0] sm:$0xff]
        %v394 = vld [vmem:[%s229 + $0x3f8] sm:$0xff]
        %v395 = vld [vmem:[%s229 + $0x400] sm:$0xff]
        %v396 = vld [vmem:[%s229 + $0x408] sm:$0xff]
        %v397 = vld [vmem:[%s229 + $0x410] sm:$0xff]
        %v398 = vld [vmem:[%s229 + $0x418] sm:$0xff]
        %v399 = vld [vmem:[%s229 + $0x420] sm:$0xff]
        %v400 = vld [vmem:[%s229 + $0x428] sm:$0xff]
        %v401 = vld [vmem:[%s229 + $0x430] sm:$0xff]
        %v402 = vld [vmem:[%s229 + $0x438] sm:$0xff]
        %v403 = vld [vmem:[%s229 + $0x440] sm:$0xff]
        %v404 = vld [vmem:[%s229 + $0x448] sm:$0xff]
        %v405 = vld [vmem:[%s229 + $0x450] sm:$0xff]
        %v406 = vld [vmem:[%s229 + $0x458] sm:$0xff]
        %v407 = vld [vmem:[%s229 + $0x460] sm:$0xff]
        %v408 = vld [vmem:[%s229 + $0x468] sm:$0xff]
        %v409 = vld [vmem:[%s229 + $0x470] sm:$0xff]
        %v410 = vld [vmem:[%s229 + $0x478] sm:$0xff]
        %v411 = vld [vmem:[%s229 + $0x480] sm:$0xff]
        %v412 = vld [vmem:[%s229 + $0x488] sm:$0xff]
        %v413 = vld [vmem:[%s229 + $0x490] sm:$0xff]
        %v414 = vld [vmem:[%s229 + $0x498] sm:$0xff]
        %v415 = vld [vmem:[%s229 + $0x4a0] sm:$0xff]
        %v416 = vld [vmem:[%s229 + $0x4a8] sm:$0xff]
        %v417 = vld [vmem:[%s229 + $0x4b0] sm:$0xff]
        %v418 = vld [vmem:[%s229 + $0x4b8] sm:$0xff]
        %v419 = vld [vmem:[%s229 + $0x4c0] sm:$0xff]
        %v420 = vld [vmem:[%s229 + $0x4c8] sm:$0xff]
        %v421 = vld [vmem:[%s229 + $0x4d0] sm:$0xff]
        %v422 = vld [vmem:[%s229 + $0x4d8] sm:$0xff]
        %v423 = vld [vmem:[%s229 + $0x4e0] sm:$0xff]
        %v424 = vld [vmem:[%s229 + $0x4e8] sm:$0xff]
        %v425 = vld [vmem:[%s229 + $0x4f0] sm:$0xff]
        %v426 = vld [vmem:[%s229 + $0x4f8] sm:$0xff]
        %v427 = vld [vmem:[%s229 + $0x500] sm:$0xff]
        %v428 = vld [vmem:[%s229 + $0x508] sm:$0xff]
        %v429 = vld [vmem:[%s229 + $0x510] sm:$0xff]
        %v430 = vld [vmem:[%s229 + $0x518] sm:$0xff]
        %v431 = vld [vmem:[%s229 + $0x520] sm:$0xff]
        %v432 = vld [vmem:[%s229 + $0x528] sm:$0xff]
        %v433 = vld [vmem:[%s229 + $0x530] sm:$0xff]
        %v434 = vld [vmem:[%s229 + $0x538] sm:$0xff]
        %v435 = vld [vmem:[%s229 + $0x540] sm:$0xff]
        %v436 = vld [vmem:[%s229 + $0x548] sm:$0xff]
        %v437 = vld [vmem:[%s229 + $0x550] sm:$0xff]
        %v438 = vld [vmem:[%s229 + $0x558] sm:$0xff]
        %v439 = vld [vmem:[%s229 + $0x560] sm:$0xff]
        %v440 = vld [vmem:[%s229 + $0x568] sm:$0xff]
        %v441 = vld [vmem:[%s229 + $0x570] sm:$0xff]
        %v442 = vld [vmem:[%s229 + $0x578] sm:$0xff]
        %v443 = vld [vmem:[%s229 + $0x580] sm:$0xff]
        %v444 = vld [vmem:[%s229 + $0x588] sm:$0xff]
        %v445 = vld [vmem:[%s229 + $0x590] sm:$0xff]
        %v446 = vld [vmem:[%s229 + $0x598] sm:$0xff]
        %v447 = vld [vmem:[%s229 + $0x5a0] sm:$0xff]
        %v448 = vld [vmem:[%s229 + $0x5a8] sm:$0xff]
        %v449 = vld [vmem:[%s229 + $0x5b0] sm:$0xff]
        %v450 = vld [vmem:[%s229 + $0x5b8] sm:$0xff]
        %v451 = vld [vmem:[%s229 + $0x5c0] sm:$0xff]
        %v452 = vld [vmem:[%s229 + $0x5c8] sm:$0xff]
        %v453 = vld [vmem:[%s229 + $0x5d0] sm:$0xff]
        %v454 = vld [vmem:[%s229 + $0x5d8] sm:$0xff]
        %v455 = vld [vmem:[%s229 + $0x5e0] sm:$0xff]
        %v456 = vld [vmem:[%s229 + $0x5e8] sm:$0xff]
        %v457 = vld [vmem:[%s229 + $0x5f0] sm:$0xff]
        %v458 = vld [vmem:[%s229 + $0x5f8] sm:$0xff]
        %v459 = vld [vmem:[#allocation2] sm:$0xff]
        %v460 = vld [vmem:[#allocation2 + $0x8] sm:$0xff]
        %v461 = vld [vmem:[#allocation2 + $0x10] sm:$0xff]
        %v462 = vld [vmem:[#allocation2 + $0x18] sm:$0xff]
        %v463 = vld [vmem:[#allocation2 + $0x20] sm:$0xff]
        %v464 = vld [vmem:[#allocation2 + $0x28] sm:$0xff]
        %v465 = vld [vmem:[#allocation2 + $0x30] sm:$0xff]
        %v466 = vld [vmem:[#allocation2 + $0x38] sm:$0xff]
        %v467 = vld [vmem:[#allocation2 + $0x40] sm:$0xff]
        %v468 = vld [vmem:[#allocation2 + $0x48] sm:$0xff]
        %v469 = vld [vmem:[#allocation2 + $0x50] sm:$0xff]
        %v470 = vld [vmem:[#allocation2 + $0x58] sm:$0xff]
        %v471 = vld [vmem:[#allocation2 + $0x60] sm:$0xff]
        %v472 = vld [vmem:[#allocation2 + $0x68] sm:$0xff]
        %v473 = vld [vmem:[#allocation2 + $0x70] sm:$0xff]
        %v474 = vld [vmem:[#allocation2 + $0x78] sm:$0xff]
        %v475 = vld [vmem:[#allocation2 + $0x80] sm:$0xff]
        %v476 = vld [vmem:[#allocation2 + $0x88] sm:$0xff]
        %v477 = vld [vmem:[#allocation2 + $0x90] sm:$0xff]
        %v478 = vld [vmem:[#allocation2 + $0x98] sm:$0xff]
        %v479 = vld [vmem:[#allocation2 + $0xa0] sm:$0xff]
        %v480 = vld [vmem:[#allocation2 + $0xa8] sm:$0xff]
        %v481 = vld [vmem:[#allocation2 + $0xb0] sm:$0xff]
        %v482 = vld [vmem:[#allocation2 + $0xb8] sm:$0xff]
        %v483 = vld [vmem:[#allocation2 + $0xc0] sm:$0xff]
        %v484 = vld [vmem:[#allocation2 + $0xc8] sm:$0xff]
        %v485 = vld [vmem:[#allocation2 + $0xd0] sm:$0xff]
        %v486 = vld [vmem:[#allocation2 + $0xd8] sm:$0xff]
        %v487 = vld [vmem:[#allocation2 + $0xe0] sm:$0xff]
        %v488 = vld [vmem:[#allocation2 + $0xe8] sm:$0xff]
        %v489 = vld [vmem:[#allocation2 + $0xf0] sm:$0xff]
        %v490 = vld [vmem:[#allocation2 + $0xf8] sm:$0xff]
        %v491 = vld [vmem:[#allocation2 + $0x100] sm:$0xff]
        %v492 = vld [vmem:[#allocation2 + $0x108] sm:$0xff]
        %v493 = vld [vmem:[#allocation2 + $0x110] sm:$0xff]
        %v494 = vld [vmem:[#allocation2 + $0x118] sm:$0xff]
        %v495 = vld [vmem:[#allocation2 + $0x120] sm:$0xff]
        %v496 = vld [vmem:[#allocation2 + $0x128] sm:$0xff]
        %v497 = vld [vmem:[#allocation2 + $0x130] sm:$0xff]
        %v498 = vld [vmem:[#allocation2 + $0x138] sm:$0xff]
        %v499 = vld [vmem:[#allocation2 + $0x140] sm:$0xff]
        %v500 = vld [vmem:[#allocation2 + $0x148] sm:$0xff]
        %v501 = vld [vmem:[#allocation2 + $0x150] sm:$0xff]
        %v502 = vld [vmem:[#allocation2 + $0x158] sm:$0xff]
        %v503 = vld [vmem:[#allocation2 + $0x160] sm:$0xff]
        %v504 = vld [vmem:[#allocation2 + $0x168] sm:$0xff]
        %v505 = vld [vmem:[#allocation2 + $0x170] sm:$0xff]
        %v506 = vld [vmem:[#allocation2 + $0x178] sm:$0xff]
        %v507 = vld [vmem:[#allocation2 + $0x180] sm:$0xff]
        %v508 = vld [vmem:[#allocation2 + $0x188] sm:$0xff]
        %v509 = vld [vmem:[#allocation2 + $0x190] sm:$0xff]
        %v510 = vld [vmem:[#allocation2 + $0x198] sm:$0xff]
        %v511 = vld [vmem:[#allocation2 + $0x1a0] sm:$0xff]
        %v512 = vld [vmem:[#allocation2 + $0x1a8] sm:$0xff]
        %v513 = vld [vmem:[#allocation2 + $0x1b0] sm:$0xff]
        %v514 = vld [vmem:[#allocation2 + $0x1b8] sm:$0xff]
        %v515 = vld [vmem:[#allocation2 + $0x1c0] sm:$0xff]
        %v516 = vld [vmem:[#allocation2 + $0x1c8] sm:$0xff]
        %v517 = vld [vmem:[#allocation2 + $0x1d0] sm:$0xff]
        %v518 = vld [vmem:[#allocation2 + $0x1d8] sm:$0xff]
        %v519 = vld [vmem:[#allocation2 + $0x1e0] sm:$0xff]
        %v520 = vld [vmem:[#allocation2 + $0x1e8] sm:$0xff]
        %v521 = vld [vmem:[#allocation2 + $0x1f0] sm:$0xff]
        %v522 = vld [vmem:[#allocation2 + $0x1f8] sm:$0xff]
        %v523 = vld [vmem:[#allocation2 + $0x200] sm:$0xff]
        %v524 = vld [vmem:[#allocation2 + $0x208] sm:$0xff]
        %v525 = vld [vmem:[#allocation2 + $0x210] sm:$0xff]
        %v526 = vld [vmem:[#allocation2 + $0x218] sm:$0xff]
        %v527 = vld [vmem:[#allocation2 + $0x220] sm:$0xff]
        %v528 = vld [vmem:[#allocation2 + $0x228] sm:$0xff]
        %v529 = vld [vmem:[#allocation2 + $0x230] sm:$0xff]
        %v530 = vld [vmem:[#allocation2 + $0x238] sm:$0xff]
        %v531 = vld [vmem:[#allocation2 + $0x240] sm:$0xff]
        %v532 = vld [vmem:[#allocation2 + $0x248] sm:$0xff]
        %v533 = vld [vmem:[#allocation2 + $0x250] sm:$0xff]
        %v534 = vld [vmem:[#allocation2 + $0x258] sm:$0xff]
        %v535 = vld [vmem:[#allocation2 + $0x260] sm:$0xff]
        %v536 = vld [vmem:[#allocation2 + $0x268] sm:$0xff]
        %v537 = vld [vmem:[#allocation2 + $0x270] sm:$0xff]
        %v538 = vld [vmem:[#allocation2 + $0x278] sm:$0xff]
        %v539 = vld [vmem:[#allocation2 + $0x280] sm:$0xff]
        %v540 = vld [vmem:[#allocation2 + $0x288] sm:$0xff]
        %v541 = vld [vmem:[#allocation2 + $0x290] sm:$0xff]
        %v542 = vld [vmem:[#allocation2 + $0x298] sm:$0xff]
        %v543 = vld [vmem:[#allocation2 + $0x2a0] sm:$0xff]
        %v544 = vld [vmem:[#allocation2 + $0x2a8] sm:$0xff]
        %v545 = vld [vmem:[#allocation2 + $0x2b0] sm:$0xff]
        %v546 = vld [vmem:[#allocation2 + $0x2b8] sm:$0xff]
        %v547 = vld [vmem:[#allocation2 + $0x2c0] sm:$0xff]
        %v548 = vld [vmem:[#allocation2 + $0x2c8] sm:$0xff]
        %v549 = vld [vmem:[#allocation2 + $0x2d0] sm:$0xff]
        %v550 = vld [vmem:[#allocation2 + $0x2d8] sm:$0xff]
        %v551 = vld [vmem:[#allocation2 + $0x2e0] sm:$0xff]
        %v552 = vld [vmem:[#allocation2 + $0x2e8] sm:$0xff]
        %v553 = vld [vmem:[#allocation2 + $0x2f0] sm:$0xff]
        %v554 = vld [vmem:[#allocation2 + $0x2f8] sm:$0xff]
        %v555 = vld [vmem:[#allocation2 + $0x300] sm:$0xff]
        %v556 = vld [vmem:[#allocation2 + $0x308] sm:$0xff]
        %v557 = vld [vmem:[#allocation2 + $0x310] sm:$0xff]
        %v558 = vld [vmem:[#allocation2 + $0x318] sm:$0xff]
        %v559 = vld [vmem:[#allocation2 + $0x320] sm:$0xff]
        %v560 = vld [vmem:[#allocation2 + $0x328] sm:$0xff]
        %v561 = vld [vmem:[#allocation2 + $0x330] sm:$0xff]
        %v562 = vld [vmem:[#allocation2 + $0x338] sm:$0xff]
        %v563 = vld [vmem:[#allocation2 + $0x340] sm:$0xff]
        %v564 = vld [vmem:[#allocation2 + $0x348] sm:$0xff]
        %v565 = vld [vmem:[#allocation2 + $0x350] sm:$0xff]
        %v566 = vld [vmem:[#allocation2 + $0x358] sm:$0xff]
        %v567 = vld [vmem:[#allocation2 + $0x360] sm:$0xff]
        %v568 = vld [vmem:[#allocation2 + $0x368] sm:$0xff]
        %v569 = vld [vmem:[#allocation2 + $0x370] sm:$0xff]
        %v570 = vld [vmem:[#allocation2 + $0x378] sm:$0xff]
        %v571 = vld [vmem:[#allocation2 + $0x380] sm:$0xff]
        %v572 = vld [vmem:[#allocation2 + $0x388] sm:$0xff]
        %v573 = vld [vmem:[#allocation2 + $0x390] sm:$0xff]
        %v574 = vld [vmem:[#allocation2 + $0x398] sm:$0xff]
        %v575 = vld [vmem:[#allocation2 + $0x3a0] sm:$0xff]
        %v576 = vld [vmem:[#allocation2 + $0x3a8] sm:$0xff]
        %v577 = vld [vmem:[#allocation2 + $0x3b0] sm:$0xff]
        %v578 = vld [vmem:[#allocation2 + $0x3b8] sm:$0xff]
        %v579 = vld [vmem:[#allocation2 + $0x3c0] sm:$0xff]
        %v580 = vld [vmem:[#allocation2 + $0x3c8] sm:$0xff]
        %v581 = vld [vmem:[#allocation2 + $0x3d0] sm:$0xff]
        %v582 = vld [vmem:[#allocation2 + $0x3d8] sm:$0xff]
        %v583 = vld [vmem:[#allocation2 + $0x3e0] sm:$0xff]
        %v584 = vld [vmem:[#allocation2 + $0x3e8] sm:$0xff]
        %v585 = vld [vmem:[#allocation2 + $0x3f0] sm:$0xff]
        %v586 = vld [vmem:[#allocation2 + $0x3f8] sm:$0xff]
        %v587 = vld [vmem:[#allocation2 + $0x400] sm:$0xff]
        %v588 = vld [vmem:[#allocation2 + $0x408] sm:$0xff]
        %v589 = vld [vmem:[#allocation2 + $0x410] sm:$0xff]
        %v590 = vld [vmem:[#allocation2 + $0x418] sm:$0xff]
        %v591 = vld [vmem:[#allocation2 + $0x420] sm:$0xff]
        %v592 = vld [vmem:[#allocation2 + $0x428] sm:$0xff]
        %v593 = vld [vmem:[#allocation2 + $0x430] sm:$0xff]
        %v594 = vld [vmem:[#allocation2 + $0x438] sm:$0xff]
        %v595 = vld [vmem:[#allocation2 + $0x440] sm:$0xff]
        %v596 = vld [vmem:[#allocation2 + $0x448] sm:$0xff]
        %v597 = vld [vmem:[#allocation2 + $0x450] sm:$0xff]
        %v598 = vld [vmem:[#allocation2 + $0x458] sm:$0xff]
        %v599 = vld [vmem:[#allocation2 + $0x460] sm:$0xff]
        %v600 = vld [vmem:[#allocation2 + $0x468] sm:$0xff]
        %v601 = vld [vmem:[#allocation2 + $0x470] sm:$0xff]
        %v602 = vld [vmem:[#allocation2 + $0x478] sm:$0xff]
        %v603 = vld [vmem:[#allocation2 + $0x480] sm:$0xff]
        %v604 = vld [vmem:[#allocation2 + $0x488] sm:$0xff]
        %v605 = vld [vmem:[#allocation2 + $0x490] sm:$0xff]
        %v606 = vld [vmem:[#allocation2 + $0x498] sm:$0xff]
        %v607 = vld [vmem:[#allocation2 + $0x4a0] sm:$0xff]
        %v608 = vld [vmem:[#allocation2 + $0x4a8] sm:$0xff]
        %v609 = vld [vmem:[#allocation2 + $0x4b0] sm:$0xff]
        %v610 = vld [vmem:[#allocation2 + $0x4b8] sm:$0xff]
        %v611 = vld [vmem:[#allocation2 + $0x4c0] sm:$0xff]
        %v612 = vld [vmem:[#allocation2 + $0x4c8] sm:$0xff]
        %v613 = vld [vmem:[#allocation2 + $0x4d0] sm:$0xff]
        %v614 = vld [vmem:[#allocation2 + $0x4d8] sm:$0xff]
        %v615 = vld [vmem:[#allocation2 + $0x4e0] sm:$0xff]
        %v616 = vld [vmem:[#allocation2 + $0x4e8] sm:$0xff]
        %v617 = vld [vmem:[#allocation2 + $0x4f0] sm:$0xff]
        %v618 = vld [vmem:[#allocation2 + $0x4f8] sm:$0xff]
        %v619 = vld [vmem:[#allocation2 + $0x500] sm:$0xff]
        %v620 = vld [vmem:[#allocation2 + $0x508] sm:$0xff]
        %v621 = vld [vmem:[#allocation2 + $0x510] sm:$0xff]
        %v622 = vld [vmem:[#allocation2 + $0x518] sm:$0xff]
        %v623 = vld [vmem:[#allocation2 + $0x520] sm:$0xff]
        %v624 = vld [vmem:[#allocation2 + $0x528] sm:$0xff]
        %v625 = vld [vmem:[#allocation2 + $0x530] sm:$0xff]
        %v626 = vld [vmem:[#allocation2 + $0x538] sm:$0xff]
        %v627 = vld [vmem:[#allocation2 + $0x540] sm:$0xff]
        %v628 = vld [vmem:[#allocation2 + $0x548] sm:$0xff]
        %v629 = vld [vmem:[#allocation2 + $0x550] sm:$0xff]
        %v630 = vld [vmem:[#allocation2 + $0x558] sm:$0xff]
        %v631 = vld [vmem:[#allocation2 + $0x560] sm:$0xff]
        %v632 = vld [vmem:[#allocation2 + $0x568] sm:$0xff]
        %v633 = vld [vmem:[#allocation2 + $0x570] sm:$0xff]
        %v634 = vld [vmem:[#allocation2 + $0x578] sm:$0xff]
        %v635 = vld [vmem:[#allocation2 + $0x580] sm:$0xff]
        %v636 = vld [vmem:[#allocation2 + $0x588] sm:$0xff]
        %v637 = vld [vmem:[#allocation2 + $0x590] sm:$0xff]
        %v638 = vld [vmem:[#allocation2 + $0x598] sm:$0xff]
        %v639 = vld [vmem:[#allocation2 + $0x5a0] sm:$0xff]
        %v640 = vld [vmem:[#allocation2 + $0x5a8] sm:$0xff]
        %v641 = vld [vmem:[#allocation2 + $0x5b0] sm:$0xff]
        %v642 = vld [vmem:[#allocation2 + $0x5b8] sm:$0xff]
        %v643 = vld [vmem:[#allocation2 + $0x5c0] sm:$0xff]
        %v644 = vld [vmem:[#allocation2 + $0x5c8] sm:$0xff]
        %v645 = vld [vmem:[#allocation2 + $0x5d0] sm:$0xff]
        %v646 = vld [vmem:[#allocation2 + $0x5d8] sm:$0xff]
        %v647 = vld [vmem:[#allocation2 + $0x5e0] sm:$0xff]
        %v648 = vld [vmem:[#allocation2 + $0x5e8] sm:$0xff]
        %v649 = vld [vmem:[#allocation2 + $0x5f0] sm:$0xff]
        %v650 = vld [vmem:[#allocation2 + $0x5f8] sm:$0xff]
        %v651 = vld [vmem:[#allocation2 + $0x600] sm:$0xff]
        %v652 = vld [vmem:[#allocation2 + $0x608] sm:$0xff]
        %v653 = vld [vmem:[#allocation2 + $0x610] sm:$0xff]
        %v654 = vld [vmem:[#allocation2 + $0x618] sm:$0xff]
        %v655 = vld [vmem:[#allocation2 + $0x620] sm:$0xff]
        %v656 = vld [vmem:[#allocation2 + $0x628] sm:$0xff]
        %v657 = vld [vmem:[#allocation2 + $0x630] sm:$0xff]
        %v658 = vld [vmem:[#allocation2 + $0x638] sm:$0xff]
        %v659 = vld [vmem:[#allocation2 + $0x640] sm:$0xff]
        %v660 = vld [vmem:[#allocation2 + $0x648] sm:$0xff]
        %v661 = vld [vmem:[#allocation2 + $0x650] sm:$0xff]
        %v662 = vld [vmem:[#allocation2 + $0x658] sm:$0xff]
        %v663 = vld [vmem:[#allocation2 + $0x660] sm:$0xff]
        %v664 = vld [vmem:[#allocation2 + $0x668] sm:$0xff]
        %v665 = vld [vmem:[#allocation2 + $0x670] sm:$0xff]
        %v666 = vld [vmem:[#allocation2 + $0x678] sm:$0xff]
        %v667 = vld [vmem:[#allocation2 + $0x680] sm:$0xff]
        %v668 = vld [vmem:[#allocation2 + $0x688] sm:$0xff]
        %v669 = vld [vmem:[#allocation2 + $0x690] sm:$0xff]
        %v670 = vld [vmem:[#allocation2 + $0x698] sm:$0xff]
        %v671 = vld [vmem:[#allocation2 + $0x6a0] sm:$0xff]
        %v672 = vld [vmem:[#allocation2 + $0x6a8] sm:$0xff]
        %v673 = vld [vmem:[#allocation2 + $0x6b0] sm:$0xff]
        %v674 = vld [vmem:[#allocation2 + $0x6b8] sm:$0xff]
        %v675 = vld [vmem:[#allocation2 + $0x6c0] sm:$0xff]
        %v676 = vld [vmem:[#allocation2 + $0x6c8] sm:$0xff]
        %v677 = vld [vmem:[#allocation2 + $0x6d0] sm:$0xff]
        %v678 = vld [vmem:[#allocation2 + $0x6d8] sm:$0xff]
        %v679 = vld [vmem:[#allocation2 + $0x6e0] sm:$0xff]
        %v680 = vld [vmem:[#allocation2 + $0x6e8] sm:$0xff]
        %v681 = vld [vmem:[#allocation2 + $0x6f0] sm:$0xff]
        %v682 = vld [vmem:[#allocation2 + $0x6f8] sm:$0xff]
        %v683 = vld [vmem:[#allocation2 + $0x700] sm:$0xff]
        %v684 = vld [vmem:[#allocation2 + $0x708] sm:$0xff]
        %v685 = vld [vmem:[#allocation2 + $0x710] sm:$0xff]
        %v686 = vld [vmem:[#allocation2 + $0x718] sm:$0xff]
        %v687 = vld [vmem:[#allocation2 + $0x720] sm:$0xff]
        %v688 = vld [vmem:[#allocation2 + $0x728] sm:$0xff]
        %v689 = vld [vmem:[#allocation2 + $0x730] sm:$0xff]
        %v690 = vld [vmem:[#allocation2 + $0x738] sm:$0xff]
        %v691 = vld [vmem:[#allocation2 + $0x740] sm:$0xff]
        %v692 = vld [vmem:[#allocation2 + $0x748] sm:$0xff]
        %v693 = vld [vmem:[#allocation2 + $0x750] sm:$0xff]
        %v694 = vld [vmem:[#allocation2 + $0x758] sm:$0xff]
        %v695 = vld [vmem:[#allocation2 + $0x760] sm:$0xff]
        %v696 = vld [vmem:[#allocation2 + $0x768] sm:$0xff]
        %v697 = vld [vmem:[#allocation2 + $0x770] sm:$0xff]
        %v698 = vld [vmem:[#allocation2 + $0x778] sm:$0xff]
        %v699 = vld [vmem:[#allocation2 + $0x780] sm:$0xff]
        %v700 = vld [vmem:[#allocation2 + $0x788] sm:$0xff]
        %v701 = vld [vmem:[#allocation2 + $0x790] sm:$0xff]
        %v702 = vld [vmem:[#allocation2 + $0x798] sm:$0xff]
        %v703 = vld [vmem:[#allocation2 + $0x7a0] sm:$0xff]
        %v704 = vld [vmem:[#allocation2 + $0x7a8] sm:$0xff]
        %v705 = vld [vmem:[#allocation2 + $0x7b0] sm:$0xff]
        %v706 = vld [vmem:[#allocation2 + $0x7b8] sm:$0xff]
        %v707 = vld [vmem:[#allocation2 + $0x7c0] sm:$0xff]
        %v708 = vld [vmem:[#allocation2 + $0x7c8] sm:$0xff]
        %v709 = vld [vmem:[#allocation2 + $0x7d0] sm:$0xff]
        %v710 = vld [vmem:[#allocation2 + $0x7d8] sm:$0xff]
        %v711 = vld [vmem:[#allocation2 + $0x7e0] sm:$0xff]
        %v712 = vld [vmem:[#allocation2 + $0x7e8] sm:$0xff]
        %v713 = vld [vmem:[#allocation2 + $0x7f0] sm:$0xff]
        %v714 = vld [vmem:[#allocation2 + $0x7f8] sm:$0xff]
        %v715 = vld [vmem:[#allocation2 + $0x800] sm:$0xff]
        %v716 = vld [vmem:[#allocation2 + $0x808] sm:$0xff]
        %v717 = vld [vmem:[#allocation2 + $0x810] sm:$0xff]
        %v718 = vld [vmem:[#allocation2 + $0x818] sm:$0xff]
        %v719 = vld [vmem:[#allocation2 + $0x820] sm:$0xff]
        %v720 = vld [vmem:[#allocation2 + $0x828] sm:$0xff]
        %v721 = vld [vmem:[#allocation2 + $0x830] sm:$0xff]
        %v722 = vld [vmem:[#allocation2 + $0x838] sm:$0xff]
        %v723 = vld [vmem:[#allocation2 + $0x840] sm:$0xff]
        %v724 = vld [vmem:[#allocation2 + $0x848] sm:$0xff]
        %v725 = vld [vmem:[#allocation2 + $0x850] sm:$0xff]
        %v726 = vld [vmem:[#allocation2 + $0x858] sm:$0xff]
        %v727 = vld [vmem:[#allocation2 + $0x860] sm:$0xff]
        %v728 = vld [vmem:[#allocation2 + $0x868] sm:$0xff]
        %v729 = vld [vmem:[#allocation2 + $0x870] sm:$0xff]
        %v730 = vld [vmem:[#allocation2 + $0x878] sm:$0xff]
        %v731 = vld [vmem:[#allocation2 + $0x880] sm:$0xff]
        %v732 = vld [vmem:[#allocation2 + $0x888] sm:$0xff]
        %v733 = vld [vmem:[#allocation2 + $0x890] sm:$0xff]
        %v734 = vld [vmem:[#allocation2 + $0x898] sm:$0xff]
        %v735 = vld [vmem:[#allocation2 + $0x8a0] sm:$0xff]
        %v736 = vld [vmem:[#allocation2 + $0x8a8] sm:$0xff]
        %v737 = vld [vmem:[#allocation2 + $0x8b0] sm:$0xff]
        %v738 = vld [vmem:[#allocation2 + $0x8b8] sm:$0xff]
        %v739 = vld [vmem:[#allocation2 + $0x8c0] sm:$0xff]
        %v740 = vld [vmem:[#allocation2 + $0x8c8] sm:$0xff]
        %v741 = vld [vmem:[#allocation2 + $0x8d0] sm:$0xff]
        %v742 = vld [vmem:[#allocation2 + $0x8d8] sm:$0xff]
        %v743 = vld [vmem:[#allocation2 + $0x8e0] sm:$0xff]
        %v744 = vld [vmem:[#allocation2 + $0x8e8] sm:$0xff]
        %v745 = vld [vmem:[#allocation2 + $0x8f0] sm:$0xff]
        %v746 = vld [vmem:[#allocation2 + $0x8f8] sm:$0xff]
        %v747 = vld [vmem:[#allocation2 + $0x900] sm:$0xff]
        %v748 = vld [vmem:[#allocation2 + $0x908] sm:$0xff]
        %v749 = vld [vmem:[#allocation2 + $0x910] sm:$0xff]
        %v750 = vld [vmem:[#allocation2 + $0x918] sm:$0xff]
        %v751 = vld [vmem:[#allocation2 + $0x920] sm:$0xff]
        %v752 = vld [vmem:[#allocation2 + $0x928] sm:$0xff]
        %v753 = vld [vmem:[#allocation2 + $0x930] sm:$0xff]
        %v754 = vld [vmem:[#allocation2 + $0x938] sm:$0xff]
        %v755 = vld [vmem:[#allocation2 + $0x940] sm:$0xff]
        %v756 = vld [vmem:[#allocation2 + $0x948] sm:$0xff]
        %v757 = vld [vmem:[#allocation2 + $0x950] sm:$0xff]
        %v758 = vld [vmem:[#allocation2 + $0x958] sm:$0xff]
        %v759 = vld [vmem:[#allocation2 + $0x960] sm:$0xff]
        %v760 = vld [vmem:[#allocation2 + $0x968] sm:$0xff]
        %v761 = vld [vmem:[#allocation2 + $0x970] sm:$0xff]
        %v762 = vld [vmem:[#allocation2 + $0x978] sm:$0xff]
        %v763 = vld [vmem:[#allocation2 + $0x980] sm:$0xff]
        %v764 = vld [vmem:[#allocation2 + $0x988] sm:$0xff]
        %v765 = vld [vmem:[#allocation2 + $0x990] sm:$0xff]
        %v766 = vld [vmem:[#allocation2 + $0x998] sm:$0xff]
        %v767 = vld [vmem:[#allocation2 + $0x9a0] sm:$0xff]
        %v768 = vld [vmem:[#allocation2 + $0x9a8] sm:$0xff]
        %v769 = vld [vmem:[#allocation2 + $0x9b0] sm:$0xff]
        %v770 = vld [vmem:[#allocation2 + $0x9b8] sm:$0xff]
        %v771 = vld [vmem:[#allocation2 + $0x9c0] sm:$0xff]
        %v772 = vld [vmem:[#allocation2 + $0x9c8] sm:$0xff]
        %v773 = vld [vmem:[#allocation2 + $0x9d0] sm:$0xff]
        %v774 = vld [vmem:[#allocation2 + $0x9d8] sm:$0xff]
        %v775 = vld [vmem:[#allocation2 + $0x9e0] sm:$0xff]
        %v776 = vld [vmem:[#allocation2 + $0x9e8] sm:$0xff]
        %v777 = vld [vmem:[#allocation2 + $0x9f0] sm:$0xff]
        %v778 = vld [vmem:[#allocation2 + $0x9f8] sm:$0xff]
        %v779 = vld [vmem:[#allocation2 + $0xa00] sm:$0xff]
        %v780 = vld [vmem:[#allocation2 + $0xa08] sm:$0xff]
        %v781 = vld [vmem:[#allocation2 + $0xa10] sm:$0xff]
        %v782 = vld [vmem:[#allocation2 + $0xa18] sm:$0xff]
        %v783 = vld [vmem:[#allocation2 + $0xa20] sm:$0xff]
        %v784 = vld [vmem:[#allocation2 + $0xa28] sm:$0xff]
        %v785 = vld [vmem:[#allocation2 + $0xa30] sm:$0xff]
        %v786 = vld [vmem:[#allocation2 + $0xa38] sm:$0xff]
        %v787 = vld [vmem:[#allocation2 + $0xa40] sm:$0xff]
        %v788 = vld [vmem:[#allocation2 + $0xa48] sm:$0xff]
        %v789 = vld [vmem:[#allocation2 + $0xa50] sm:$0xff]
        %v790 = vld [vmem:[#allocation2 + $0xa58] sm:$0xff]
        %v791 = vld [vmem:[#allocation2 + $0xa60] sm:$0xff]
        %v792 = vld [vmem:[#allocation2 + $0xa68] sm:$0xff]
        %v793 = vld [vmem:[#allocation2 + $0xa70] sm:$0xff]
        %v794 = vld [vmem:[#allocation2 + $0xa78] sm:$0xff]
        %v795 = vld [vmem:[#allocation2 + $0xa80] sm:$0xff]
        %v796 = vld [vmem:[#allocation2 + $0xa88] sm:$0xff]
        %v797 = vld [vmem:[#allocation2 + $0xa90] sm:$0xff]
        %v798 = vld [vmem:[#allocation2 + $0xa98] sm:$0xff]
        %v799 = vld [vmem:[#allocation2 + $0xaa0] sm:$0xff]
        %v800 = vld [vmem:[#allocation2 + $0xaa8] sm:$0xff]
        %v801 = vld [vmem:[#allocation2 + $0xab0] sm:$0xff]
        %v802 = vld [vmem:[#allocation2 + $0xab8] sm:$0xff]
        %v803 = vld [vmem:[#allocation2 + $0xac0] sm:$0xff]
        %v804 = vld [vmem:[#allocation2 + $0xac8] sm:$0xff]
        %v805 = vld [vmem:[#allocation2 + $0xad0] sm:$0xff]
        %v806 = vld [vmem:[#allocation2 + $0xad8] sm:$0xff]
        %v807 = vld [vmem:[#allocation2 + $0xae0] sm:$0xff]
        %v808 = vld [vmem:[#allocation2 + $0xae8] sm:$0xff]
        %v809 = vld [vmem:[#allocation2 + $0xaf0] sm:$0xff]
        %v810 = vld [vmem:[#allocation2 + $0xaf8] sm:$0xff]
        %v811 = vld [vmem:[#allocation2 + $0xb00] sm:$0xff]
        %v812 = vld [vmem:[#allocation2 + $0xb08] sm:$0xff]
        %v813 = vld [vmem:[#allocation2 + $0xb10] sm:$0xff]
        %v814 = vld [vmem:[#allocation2 + $0xb18] sm:$0xff]
        %v815 = vld [vmem:[#allocation2 + $0xb20] sm:$0xff]
        %v816 = vld [vmem:[#allocation2 + $0xb28] sm:$0xff]
        %v817 = vld [vmem:[#allocation2 + $0xb30] sm:$0xff]
        %v818 = vld [vmem:[#allocation2 + $0xb38] sm:$0xff]
        %v819 = vld [vmem:[#allocation2 + $0xb40] sm:$0xff]
        %v820 = vld [vmem:[#allocation2 + $0xb48] sm:$0xff]
        %v821 = vld [vmem:[#allocation2 + $0xb50] sm:$0xff]
        %v822 = vld [vmem:[#allocation2 + $0xb58] sm:$0xff]
        %v823 = vld [vmem:[#allocation2 + $0xb60] sm:$0xff]
        %v824 = vld [vmem:[#allocation2 + $0xb68] sm:$0xff]
        %v825 = vld [vmem:[#allocation2 + $0xb70] sm:$0xff]
        %v826 = vld [vmem:[#allocation2 + $0xb78] sm:$0xff]
        %v827 = vld [vmem:[#allocation2 + $0xb80] sm:$0xff]
        %v828 = vld [vmem:[#allocation2 + $0xb88] sm:$0xff]
        %v829 = vld [vmem:[#allocation2 + $0xb90] sm:$0xff]
        %v830 = vld [vmem:[#allocation2 + $0xb98] sm:$0xff]
        %v831 = vld [vmem:[#allocation2 + $0xba0] sm:$0xff]
        %v832 = vld [vmem:[#allocation2 + $0xba8] sm:$0xff]
        %v833 = vld [vmem:[#allocation2 + $0xbb0] sm:$0xff]
        %v834 = vld [vmem:[#allocation2 + $0xbb8] sm:$0xff]
        %v835 = vld [vmem:[#allocation2 + $0xbc0] sm:$0xff]
        %v836 = vld [vmem:[#allocation2 + $0xbc8] sm:$0xff]
        %v837 = vld [vmem:[#allocation2 + $0xbd0] sm:$0xff]
        %v838 = vld [vmem:[#allocation2 + $0xbd8] sm:$0xff]
        %v839 = vld [vmem:[#allocation2 + $0xbe0] sm:$0xff]
        %v840 = vld [vmem:[#allocation2 + $0xbe8] sm:$0xff]
        %v841 = vld [vmem:[#allocation2 + $0xbf0] sm:$0xff]
        %v842 = vld [vmem:[#allocation2 + $0xbf8] sm:$0xff]
        %v843 = vld [vmem:[%s263] sm:$0xff]
        %v844 = vld [vmem:[%s263 + $0x8] sm:$0xff]
        %v845 = vld [vmem:[%s263 + $0x10] sm:$0xff]
        %v846 = vld [vmem:[%s263 + $0x18] sm:$0xff]
        %v847 = vld [vmem:[%s263 + $0x20] sm:$0xff]
        %v848 = vld [vmem:[%s263 + $0x28] sm:$0xff]
        %v849 = vld [vmem:[%s263 + $0x30] sm:$0xff]
        %v850 = vld [vmem:[%s263 + $0x38] sm:$0xff]
        %v851 = vld [vmem:[%s263 + $0x40] sm:$0xff]
        %v852 = vld [vmem:[%s263 + $0x48] sm:$0xff]
        %v853 = vld [vmem:[%s263 + $0x50] sm:$0xff]
        %v854 = vld [vmem:[%s263 + $0x58] sm:$0xff]
        %v855 = vld [vmem:[%s263 + $0x60] sm:$0xff]
        %v856 = vld [vmem:[%s263 + $0x68] sm:$0xff]
        %v857 = vld [vmem:[%s263 + $0x70] sm:$0xff]
        %v858 = vld [vmem:[%s263 + $0x78] sm:$0xff]
        %860 = vset.pattern.permute.xlu0 0
        %861 = vperm.xlu0 %860, %v843
        %v862 = vpop.permute.xlu0 %861
        %865 = vset.pattern.permute.xlu0 0
        %866 = vperm.xlu0 %865, %v844
        %v867 = vpop.permute.xlu0 %866
        %870 = vset.pattern.permute.xlu0 0
        %871 = vperm.xlu0 %870, %v845
        %v872 = vpop.permute.xlu0 %871
        %875 = vset.pattern.permute.xlu0 0
        %876 = vperm.xlu0 %875, %v846
        %v877 = vpop.permute.xlu0 %876
        %880 = vset.pattern.permute.xlu0 0
        %881 = vperm.xlu0 %880, %v847
        %v882 = vpop.permute.xlu0 %881
        %885 = vset.pattern.permute.xlu0 0
        %886 = vperm.xlu0 %885, %v848
        %v887 = vpop.permute.xlu0 %886
        %890 = vset.pattern.permute.xlu0 0
        %891 = vperm.xlu0 %890, %v849
        %v892 = vpop.permute.xlu0 %891
        %895 = vset.pattern.permute.xlu0 0
        %896 = vperm.xlu0 %895, %v850
        %v897 = vpop.permute.xlu0 %896
        %900 = vset.pattern.permute.xlu0 0
        %901 = vperm.xlu0 %900, %v851
        %v902 = vpop.permute.xlu0 %901
        %905 = vset.pattern.permute.xlu0 0
        %906 = vperm.xlu0 %905, %v852
        %v907 = vpop.permute.xlu0 %906
        %910 = vset.pattern.permute.xlu0 0
        %911 = vperm.xlu0 %910, %v853
        %v912 = vpop.permute.xlu0 %911
        %915 = vset.pattern.permute.xlu0 0
        %916 = vperm.xlu0 %915, %v854
        %v917 = vpop.permute.xlu0 %916
        %920 = vset.pattern.permute.xlu0 0
        %921 = vperm.xlu0 %920, %v855
        %v922 = vpop.permute.xlu0 %921
        %925 = vset.pattern.permute.xlu0 0
        %926 = vperm.xlu0 %925, %v856
        %v927 = vpop.permute.xlu0 %926
        %930 = vset.pattern.permute.xlu0 0
        %931 = vperm.xlu0 %930, %v857
        %v932 = vpop.permute.xlu0 %931
        %935 = vset.pattern.permute.xlu0 0
        %936 = vperm.xlu0 %935, %v858
        %v937 = vpop.permute.xlu0 %936
        %939 = vmatprep.subr.mxu0 %v460
        %940 = vmatpush1.xpose.msra.mxu0 %v459
        %941 = vmatprep.subr.mxu0 %v472
        %942 = vmatpush1.xpose.msra.mxu0 %v471
        %943 = vmatprep.subr.mxu0 %v484
        %944 = vmatpush1.xpose.msra.mxu0 %v483
        %945 = vmatprep.subr.mxu0 %v496
        %946 = vmatpush1.xpose.msra.mxu0 %v495
        %947 = vmatprep.subr.mxu0 %v508
        %948 = vmatpush1.xpose.msra.mxu0 %v507
        %949 = vmatprep.subr.mxu0 %v520
        %950 = vmatpush1.xpose.msra.mxu0 %v519
        %951 = vmatprep.subr.mxu0 %v532
        %952 = vmatpush1.xpose.msra.mxu0 %v531
        %953 = vmatprep.subr.mxu0 %v544
        %954 = vmatpush1.xpose.msra.mxu0 %v543
        %955 = vmatprep.subr.mxu0 %v556
        %956 = vmatpush1.xpose.msra.mxu0 %v555
        %957 = vmatprep.subr.mxu0 %v568
        %958 = vmatpush1.xpose.msra.mxu0 %v567
        %959 = vmatprep.subr.mxu0 %v580
        %960 = vmatpush1.xpose.msra.mxu0 %v579
        %961 = vmatprep.subr.mxu0 %v592
        %962 = vmatpush1.xpose.msra.mxu0 %v591
        %963 = vmatprep.subr.mxu0 %v604
        %964 = vmatpush1.xpose.msra.mxu0 %v603
        %965 = vmatprep.subr.mxu0 %v616
        %966 = vmatpush1.xpose.msra.mxu0 %v615
        %967 = vmatprep.subr.mxu0 %v628
        %968 = vmatpush1.xpose.msra.mxu0 %v627
        %969 = vmatprep.subr.mxu0 %v640
        %970 = vmatpush1.xpose.msra.mxu0 %v639
        %971 = vmatprep.subr.mxu0 %v652
        %972 = vmatpush1.xpose.msra.mxu0 %v651
        %973 = vmatprep.subr.mxu0 %v664
        %974 = vmatpush1.xpose.msra.mxu0 %v663
        %975 = vmatprep.subr.mxu0 %v676
        %976 = vmatpush1.xpose.msra.mxu0 %v675
        %977 = vmatprep.subr.mxu0 %v688
        %978 = vmatpush1.xpose.msra.mxu0 %v687
        %979 = vmatprep.subr.mxu0 %v700
        %980 = vmatpush1.xpose.msra.mxu0 %v699
        %981 = vmatprep.subr.mxu0 %v712
        %982 = vmatpush1.xpose.msra.mxu0 %v711
        %983 = vmatprep.subr.mxu0 %v724
        %984 = vmatpush1.xpose.msra.mxu0 %v723
        %985 = vmatprep.subr.mxu0 %v736
        %986 = vmatpush1.xpose.msra.mxu0 %v735
        %987 = vmatprep.subr.mxu0 %v748
        %988 = vmatpush1.xpose.msra.mxu0 %v747
        %989 = vmatprep.subr.mxu0 %v760
        %990 = vmatpush1.xpose.msra.mxu0 %v759
        %991 = vmatprep.subr.mxu0 %v772
        %992 = vmatpush1.xpose.msra.mxu0 %v771
        %993 = vmatprep.subr.mxu0 %v784
        %994 = vmatpush1.xpose.msra.mxu0 %v783
        %995 = vmatprep.subr.mxu0 %v796
        %996 = vmatpush1.xpose.msra.mxu0 %v795
        %997 = vmatprep.subr.mxu0 %v808
        %998 = vmatpush1.xpose.msra.mxu0 %v807
        %999 = vmatprep.subr.mxu0 %v820
        %1000 = vmatpush1.xpose.msra.mxu0 %v819
        %1001 = vmatprep.subr.mxu0 %v832
        %1002 = vmatpush1.xpose.msra.mxu0 %v831
        %1003 = vmatprep.mubr.f32.mxu0 %v268
        %1004 = vmatmul.mubr.f32.gmra.mrb[0].mxu0 %v267
        %v1005 = vpop.f32.mrb[0].mxu0
        %v1006 = vadd.f32 %v862, %v1005
        %v1007 = vpop.f32.mrb[0].mxu0
        %v1008 = vadd.f32 %v862, %v1007
        %1009 = vmatprep.mubr.f32.mxu0 %v280
        %1010 = vmatmul.mubr.f32.gmra.mrb[0].mxu0 %v279
        %v1011 = vpop.f32.mrb[0].mxu0
        %v1012 = vadd.f32 %v867, %v1011
        %v1013 = vpop.f32.mrb[0].mxu0
        %v1014 = vadd.f32 %v867, %v1013
        %1015 = vmatprep.mubr.f32.mxu0 %v292
        %1016 = vmatmul.mubr.f32.gmra.mrb[0].mxu0 %v291
        %v1017 = vpop.f32.mrb[0].mxu0
        %v1018 = vadd.f32 %v872, %v1017
        %v1019 = vpop.f32.mrb[0].mxu0
        %v1020 = vadd.f32 %v872, %v1019
        %1021 = vmatprep.mubr.f32.mxu0 %v304
        %1022 = vmatmul.mubr.f32.gmra.mrb[0].mxu0 %v303
        %v1023 = vpop.f32.mrb[0].mxu0
        %v1024 = vadd.f32 %v877, %v1023
        %v1025 = vpop.f32.mrb[0].mxu0
        %v1026 = vadd.f32 %v877, %v1025
        %1027 = vmatprep.mubr.f32.mxu0 %v316
        %1028 = vmatmul.mubr.f32.gmra.mrb[0].mxu0 %v315
        %v1029 = vpop.f32.mrb[0].mxu0
        %v1030 = vadd.f32 %v882, %v1029
        %v1031 = vpop.f32.mrb[0].mxu0
        %v1032 = vadd.f32 %v882, %v1031
        %1033 = vmatprep.mubr.f32.mxu0 %v328
        %1034 = vmatmul.mubr.f32.gmra.mrb[0].mxu0 %v327
        %v1035 = vpop.f32.mrb[0].mxu0
        %v1036 = vadd.f32 %v887, %v1035
        %v1037 = vpop.f32.mrb[0].mxu0
        %v1038 = vadd.f32 %v887, %v1037
        %1039 = vmatprep.mubr.f32.mxu0 %v340
        %1040 = vmatmul.mubr.f32.gmra.mrb[0].mxu0 %v339
        %v1041 = vpop.f32.mrb[0].mxu0
        %v1042 = vadd.f32 %v892, %v1041
        %v1043 = vpop.f32.mrb[0].mxu0
        %v1044 = vadd.f32 %v892, %v1043
        %1045 = vmatprep.mubr.f32.mxu0 %v352
        %1046 = vmatmul.mubr.f32.gmra.mrb[0].mxu0 %v351
        %v1047 = vpop.f32.mrb[0].mxu0
        %v1048 = vadd.f32 %v897, %v1047
        %v1049 = vpop.f32.mrb[0].mxu0
        %v1050 = vadd.f32 %v897, %v1049
        %1051 = vmatprep.mubr.f32.mxu0 %v364
        %1052 = vmatmul.mubr.f32.gmra.mrb[0].mxu0 %v363
        %v1053 = vpop.f32.mrb[0].mxu0
        %v1054 = vadd.f32 %v902, %v1053
        %v1055 = vpop.f32.mrb[0].mxu0
        %v1056 = vadd.f32 %v902, %v1055
        %1057 = vmatprep.mubr.f32.mxu0 %v376
        %1058 = vmatmul.mubr.f32.gmra.mrb[0].mxu0 %v375
        %v1059 = vpop.f32.mrb[0].mxu0
        %v1060 = vadd.f32 %v907, %v1059
        %v1061 = vpop.f32.mrb[0].mxu0
        %v1062 = vadd.f32 %v907, %v1061
        %1063 = vmatprep.mubr.f32.mxu0 %v388
        %1064 = vmatmul.mubr.f32.gmra.mrb[0].mxu0 %v387
        %v1065 = vpop.f32.mrb[0].mxu0
        %v1066 = vadd.f32 %v912, %v1065
        %v1067 = vpop.f32.mrb[0].mxu0
        %v1068 = vadd.f32 %v912, %v1067
        %1069 = vmatprep.mubr.f32.mxu0 %v400
        %1070 = vmatmul.mubr.f32.gmra.mrb[0].mxu0 %v399
        %v1071 = vpop.f32.mrb[0].mxu0
        %v1072 = vadd.f32 %v917, %v1071
        %v1073 = vpop.f32.mrb[0].mxu0
        %v1074 = vadd.f32 %v917, %v1073
        %1075 = vmatprep.mubr.f32.mxu0 %v412
        %1076 = vmatmul.mubr.f32.gmra.mrb[0].mxu0 %v411
        %v1077 = vpop.f32.mrb[0].mxu0
        %v1078 = vadd.f32 %v922, %v1077
        %v1079 = vpop.f32.mrb[0].mxu0
        %v1080 = vadd.f32 %v922, %v1079
        %1081 = vmatprep.mubr.f32.mxu0 %v424
        %1082 = vmatmul.mubr.f32.gmra.mrb[0].mxu0 %v423
        %v1083 = vpop.f32.mrb[0].mxu0
        %v1084 = vadd.f32 %v927, %v1083
        %v1085 = vpop.f32.mrb[0].mxu0
        %v1086 = vadd.f32 %v927, %v1085
        %1087 = vmatprep.mubr.f32.mxu0 %v436
        %1088 = vmatmul.mubr.f32.gmra.mrb[0].mxu0 %v435
        %v1089 = vpop.f32.mrb[0].mxu0
        %v1090 = vadd.f32 %v932, %v1089
        %v1091 = vpop.f32.mrb[0].mxu0
        %v1092 = vadd.f32 %v932, %v1091
        %1093 = vmatprep.mubr.f32.mxu0 %v448
        %1094 = vmatmul.mubr.f32.gmra.mrb[0].mxu0 %v447
        %v1095 = vpop.f32.mrb[0].mxu0
        %v1096 = vadd.f32 %v937, %v1095
        %v1097 = vpop.f32.mrb[0].mxu0
        %v1098 = vadd.f32 %v937, %v1097
        %1099 = vdwg.mxu0
        %1100 = vmatprep.subr.mxu0 %v462
        %1101 = vmatpush1.xpose.msra.mxu0 %v461
        %1102 = vmatprep.subr.mxu0 %v474
        %1103 = vmatpush1.xpose.msra.mxu0 %v473
        %1104 = vmatprep.subr.mxu0 %v486
        %1105 = vmatpush1.xpose.msra.mxu0 %v485
        %1106 = vmatprep.subr.mxu0 %v498
        %1107 = vmatpush1.xpose.msra.mxu0 %v497
        %1108 = vmatprep.subr.mxu0 %v510
        %1109 = vmatpush1.xpose.msra.mxu0 %v509
        %1110 = vmatprep.subr.mxu0 %v522
        %1111 = vmatpush1.xpose.msra.mxu0 %v521
        %1112 = vmatprep.subr.mxu0 %v534
        %1113 = vmatpush1.xpose.msra.mxu0 %v533
        %1114 = vmatprep.subr.mxu0 %v546
        %1115 = vmatpush1.xpose.msra.mxu0 %v545
        %1116 = vmatprep.subr.mxu0 %v558
        %1117 = vmatpush1.xpose.msra.mxu0 %v557
        %1118 = vmatprep.subr.mxu0 %v570
        %1119 = vmatpush1.xpose.msra.mxu0 %v569
        %1120 = vmatprep.subr.mxu0 %v582
        %1121 = vmatpush1.xpose.msra.mxu0 %v581
        %1122 = vmatprep.subr.mxu0 %v594
        %1123 = vmatpush1.xpose.msra.mxu0 %v593
        %1124 = vmatprep.subr.mxu0 %v606
        %1125 = vmatpush1.xpose.msra.mxu0 %v605
        %1126 = vmatprep.subr.mxu0 %v618
        %1127 = vmatpush1.xpose.msra.mxu0 %v617
        %1128 = vmatprep.subr.mxu0 %v630
        %1129 = vmatpush1.xpose.msra.mxu0 %v629
        %1130 = vmatprep.subr.mxu0 %v642
        %1131 = vmatpush1.xpose.msra.mxu0 %v641
        %1132 = vmatprep.subr.mxu0 %v654
        %1133 = vmatpush1.xpose.msra.mxu0 %v653
        %1134 = vmatprep.subr.mxu0 %v666
        %1135 = vmatpush1.xpose.msra.mxu0 %v665
        %1136 = vmatprep.subr.mxu0 %v678
        %1137 = vmatpush1.xpose.msra.mxu0 %v677
        %1138 = vmatprep.subr.mxu0 %v690
        %1139 = vmatpush1.xpose.msra.mxu0 %v689
        %1140 = vmatprep.subr.mxu0 %v702
        %1141 = vmatpush1.xpose.msra.mxu0 %v701
        %1142 = vmatprep.subr.mxu0 %v714
        %1143 = vmatpush1.xpose.msra.mxu0 %v713
        %1144 = vmatprep.subr.mxu0 %v726
        %1145 = vmatpush1.xpose.msra.mxu0 %v725
        %1146 = vmatprep.subr.mxu0 %v738
        %1147 = vmatpush1.xpose.msra.mxu0 %v737
        %1148 = vmatprep.subr.mxu0 %v750
        %1149 = vmatpush1.xpose.msra.mxu0 %v749
        %1150 = vmatprep.subr.mxu0 %v762
        %1151 = vmatpush1.xpose.msra.mxu0 %v761
        %1152 = vmatprep.subr.mxu0 %v774
        %1153 = vmatpush1.xpose.msra.mxu0 %v773
        %1154 = vmatprep.subr.mxu0 %v786
        %1155 = vmatpush1.xpose.msra.mxu0 %v785
        %1156 = vmatprep.subr.mxu0 %v798
        %1157 = vmatpush1.xpose.msra.mxu0 %v797
        %1158 = vmatprep.subr.mxu0 %v810
        %1159 = vmatpush1.xpose.msra.mxu0 %v809
        %1160 = vmatprep.subr.mxu0 %v822
        %1161 = vmatpush1.xpose.msra.mxu0 %v821
        %1162 = vmatprep.subr.mxu0 %v834
        %1163 = vmatpush1.xpose.msra.mxu0 %v833
        %1164 = vmatprep.mubr.f32.mxu0 %v270
        %1165 = vmatmul.mubr.f32.gmra.mrb[0].mxu0 %v269
        %v1166 = vpop.f32.mrb[0].mxu0
        %v1167 = vadd.f32 %v1006, %v1166
        %v1168 = vpop.f32.mrb[0].mxu0
        %v1169 = vadd.f32 %v1008, %v1168
        %1170 = vmatprep.mubr.f32.mxu0 %v282
        %1171 = vmatmul.mubr.f32.gmra.mrb[0].mxu0 %v281
        %v1172 = vpop.f32.mrb[0].mxu0
        %v1173 = vadd.f32 %v1012, %v1172
        %v1174 = vpop.f32.mrb[0].mxu0
        %v1175 = vadd.f32 %v1014, %v1174
        %1176 = vmatprep.mubr.f32.mxu0 %v294
        %1177 = vmatmul.mubr.f32.gmra.mrb[0].mxu0 %v293
        %v1178 = vpop.f32.mrb[0].mxu0
        %v1179 = vadd.f32 %v1018, %v1178
        %v1180 = vpop.f32.mrb[0].mxu0
        %v1181 = vadd.f32 %v1020, %v1180
        %1182 = vmatprep.mubr.f32.mxu0 %v306
        %1183 = vmatmul.mubr.f32.gmra.mrb[0].mxu0 %v305
        %v1184 = vpop.f32.mrb[0].mxu0
        %v1185 = vadd.f32 %v1024, %v1184
        %v1186 = vpop.f32.mrb[0].mxu0
        %v1187 = vadd.f32 %v1026, %v1186
        %1188 = vmatprep.mubr.f32.mxu0 %v318
        %1189 = vmatmul.mubr.f32.gmra.mrb[0].mxu0 %v317
        %v1190 = vpop.f32.mrb[0].mxu0
        %v1191 = vadd.f32 %v1030, %v1190
        %v1192 = vpop.f32.mrb[0].mxu0
        %v1193 = vadd.f32 %v1032, %v1192
        %1194 = vmatprep.mubr.f32.mxu0 %v330
        %1195 = vmatmul.mubr.f32.gmra.mrb[0].mxu0 %v329
        %v1196 = vpop.f32.mrb[0].mxu0
        %v1197 = vadd.f32 %v1036, %v1196
        %v1198 = vpop.f32.mrb[0].mxu0
        %v1199 = vadd.f32 %v1038, %v1198
        %1200 = vmatprep.mubr.f32.mxu0 %v342
        %1201 = vmatmul.mubr.f32.gmra.mrb[0].mxu0 %v341
        %v1202 = vpop.f32.mrb[0].mxu0
        %v1203 = vadd.f32 %v1042, %v1202
        %v1204 = vpop.f32.mrb[0].mxu0
        %v1205 = vadd.f32 %v1044, %v1204
        %1206 = vmatprep.mubr.f32.mxu0 %v354
        %1207 = vmatmul.mubr.f32.gmra.mrb[0].mxu0 %v353
        %v1208 = vpop.f32.mrb[0].mxu0
        %v1209 = vadd.f32 %v1048, %v1208
        %v1210 = vpop.f32.mrb[0].mxu0
        %v1211 = vadd.f32 %v1050, %v1210
        %1212 = vmatprep.mubr.f32.mxu0 %v366
        %1213 = vmatmul.mubr.f32.gmra.mrb[0].mxu0 %v365
        %v1214 = vpop.f32.mrb[0].mxu0
        %v1215 = vadd.f32 %v1054, %v1214
        %v1216 = vpop.f32.mrb[0].mxu0
        %v1217 = vadd.f32 %v1056, %v1216
        %1218 = vmatprep.mubr.f32.mxu0 %v378
        %1219 = vmatmul.mubr.f32.gmra.mrb[0].mxu0 %v377
        %v1220 = vpop.f32.mrb[0].mxu0
        %v1221 = vadd.f32 %v1060, %v1220
        %v1222 = vpop.f32.mrb[0].mxu0
        %v1223 = vadd.f32 %v1062, %v1222
        %1224 = vmatprep.mubr.f32.mxu0 %v390
        %1225 = vmatmul.mubr.f32.gmra.mrb[0].mxu0 %v389
        %v1226 = vpop.f32.mrb[0].mxu0
        %v1227 = vadd.f32 %v1066, %v1226
        %v1228 = vpop.f32.mrb[0].mxu0
        %v1229 = vadd.f32 %v1068, %v1228
        %1230 = vmatprep.mubr.f32.mxu0 %v402
        %1231 = vmatmul.mubr.f32.gmra.mrb[0].mxu0 %v401
        %v1232 = vpop.f32.mrb[0].mxu0
        %v1233 = vadd.f32 %v1072, %v1232
        %v1234 = vpop.f32.mrb[0].mxu0
        %v1235 = vadd.f32 %v1074, %v1234
        %1236 = vmatprep.mubr.f32.mxu0 %v414
        %1237 = vmatmul.mubr.f32.gmra.mrb[0].mxu0 %v413
        %v1238 = vpop.f32.mrb[0].mxu0
        %v1239 = vadd.f32 %v1078, %v1238
        %v1240 = vpop.f32.mrb[0].mxu0
        %v1241 = vadd.f32 %v1080, %v1240
        %1242 = vmatprep.mubr.f32.mxu0 %v426
        %1243 = vmatmul.mubr.f32.gmra.mrb[0].mxu0 %v425
        %v1244 = vpop.f32.mrb[0].mxu0
        %v1245 = vadd.f32 %v1084, %v1244
        %v1246 = vpop.f32.mrb[0].mxu0
        %v1247 = vadd.f32 %v1086, %v1246
        %1248 = vmatprep.mubr.f32.mxu0 %v438
        %1249 = vmatmul.mubr.f32.gmra.mrb[0].mxu0 %v437
        %v1250 = vpop.f32.mrb[0].mxu0
        %v1251 = vadd.f32 %v1090, %v1250
        %v1252 = vpop.f32.mrb[0].mxu0
        %v1253 = vadd.f32 %v1092, %v1252
        %1254 = vmatprep.mubr.f32.mxu0 %v450
        %1255 = vmatmul.mubr.f32.gmra.mrb[0].mxu0 %v449
        %v1256 = vpop.f32.mrb[0].mxu0
        %v1257 = vadd.f32 %v1096, %v1256
        %v1258 = vpop.f32.mrb[0].mxu0
        %v1259 = vadd.f32 %v1098, %v1258
        %1260 = vdwg.mxu0
        %1261 = vmatprep.subr.mxu0 %v464
        %1262 = vmatpush1.xpose.msra.mxu0 %v463
        %1263 = vmatprep.subr.mxu0 %v476
        %1264 = vmatpush1.xpose.msra.mxu0 %v475
        %1265 = vmatprep.subr.mxu0 %v488
        %1266 = vmatpush1.xpose.msra.mxu0 %v487
        %1267 = vmatprep.subr.mxu0 %v500
        %1268 = vmatpush1.xpose.msra.mxu0 %v499
        %1269 = vmatprep.subr.mxu0 %v512
        %1270 = vmatpush1.xpose.msra.mxu0 %v511
        %1271 = vmatprep.subr.mxu0 %v524
        %1272 = vmatpush1.xpose.msra.mxu0 %v523
        %1273 = vmatprep.subr.mxu0 %v536
        %1274 = vmatpush1.xpose.msra.mxu0 %v535
        %1275 = vmatprep.subr.mxu0 %v548
        %1276 = vmatpush1.xpose.msra.mxu0 %v547
        %1277 = vmatprep.subr.mxu0 %v560
        %1278 = vmatpush1.xpose.msra.mxu0 %v559
        %1279 = vmatprep.subr.mxu0 %v572
        %1280 = vmatpush1.xpose.msra.mxu0 %v571
        %1281 = vmatprep.subr.mxu0 %v584
        %1282 = vmatpush1.xpose.msra.mxu0 %v583
        %1283 = vmatprep.subr.mxu0 %v596
        %1284 = vmatpush1.xpose.msra.mxu0 %v595
        %1285 = vmatprep.subr.mxu0 %v608
        %1286 = vmatpush1.xpose.msra.mxu0 %v607
        %1287 = vmatprep.subr.mxu0 %v620
        %1288 = vmatpush1.xpose.msra.mxu0 %v619
        %1289 = vmatprep.subr.mxu0 %v632
        %1290 = vmatpush1.xpose.msra.mxu0 %v631
        %1291 = vmatprep.subr.mxu0 %v644
        %1292 = vmatpush1.xpose.msra.mxu0 %v643
        %1293 = vmatprep.subr.mxu0 %v656
        %1294 = vmatpush1.xpose.msra.mxu0 %v655
        %1295 = vmatprep.subr.mxu0 %v668
        %1296 = vmatpush1.xpose.msra.mxu0 %v667
        %1297 = vmatprep.subr.mxu0 %v680
        %1298 = vmatpush1.xpose.msra.mxu0 %v679
        %1299 = vmatprep.subr.mxu0 %v692
        %1300 = vmatpush1.xpose.msra.mxu0 %v691
        %1301 = vmatprep.subr.mxu0 %v704
        %1302 = vmatpush1.xpose.msra.mxu0 %v703
        %1303 = vmatprep.subr.mxu0 %v716
        %1304 = vmatpush1.xpose.msra.mxu0 %v715
        %1305 = vmatprep.subr.mxu0 %v728
        %1306 = vmatpush1.xpose.msra.mxu0 %v727
        %1307 = vmatprep.subr.mxu0 %v740
        %1308 = vmatpush1.xpose.msra.mxu0 %v739
        %1309 = vmatprep.subr.mxu0 %v752
        %1310 = vmatpush1.xpose.msra.mxu0 %v751
        %1311 = vmatprep.subr.mxu0 %v764
        %1312 = vmatpush1.xpose.msra.mxu0 %v763
        %1313 = vmatprep.subr.mxu0 %v776
        %1314 = vmatpush1.xpose.msra.mxu0 %v775
        %1315 = vmatprep.subr.mxu0 %v788
        %1316 = vmatpush1.xpose.msra.mxu0 %v787
        %1317 = vmatprep.subr.mxu0 %v800
        %1318 = vmatpush1.xpose.msra.mxu0 %v799
        %1319 = vmatprep.subr.mxu0 %v812
        %1320 = vmatpush1.xpose.msra.mxu0 %v811
        %1321 = vmatprep.subr.mxu0 %v824
        %1322 = vmatpush1.xpose.msra.mxu0 %v823
        %1323 = vmatprep.subr.mxu0 %v836
        %1324 = vmatpush1.xpose.msra.mxu0 %v835
        %1325 = vmatprep.mubr.f32.mxu0 %v272
        %1326 = vmatmul.mubr.f32.gmra.mrb[0].mxu0 %v271
        %v1327 = vpop.f32.mrb[0].mxu0
        %v1328 = vadd.f32 %v1167, %v1327
        %v1329 = vpop.f32.mrb[0].mxu0
        %v1330 = vadd.f32 %v1169, %v1329
        %1331 = vmatprep.mubr.f32.mxu0 %v284
        %1332 = vmatmul.mubr.f32.gmra.mrb[0].mxu0 %v283
        %v1333 = vpop.f32.mrb[0].mxu0
        %v1334 = vadd.f32 %v1173, %v1333
        %v1335 = vpop.f32.mrb[0].mxu0
        %v1336 = vadd.f32 %v1175, %v1335
        %1337 = vmatprep.mubr.f32.mxu0 %v296
        %1338 = vmatmul.mubr.f32.gmra.mrb[0].mxu0 %v295
        %v1339 = vpop.f32.mrb[0].mxu0
        %v1340 = vadd.f32 %v1179, %v1339
        %v1341 = vpop.f32.mrb[0].mxu0
        %v1342 = vadd.f32 %v1181, %v1341
        %1343 = vmatprep.mubr.f32.mxu0 %v308
        %1344 = vmatmul.mubr.f32.gmra.mrb[0].mxu0 %v307
        %v1345 = vpop.f32.mrb[0].mxu0
        %v1346 = vadd.f32 %v1185, %v1345
        %v1347 = vpop.f32.mrb[0].mxu0
        %v1348 = vadd.f32 %v1187, %v1347
        %1349 = vmatprep.mubr.f32.mxu0 %v320
        %1350 = vmatmul.mubr.f32.gmra.mrb[0].mxu0 %v319
        %v1351 = vpop.f32.mrb[0].mxu0
        %v1352 = vadd.f32 %v1191, %v1351
        %v1353 = vpop.f32.mrb[0].mxu0
        %v1354 = vadd.f32 %v1193, %v1353
        %1355 = vmatprep.mubr.f32.mxu0 %v332
        %1356 = vmatmul.mubr.f32.gmra.mrb[0].mxu0 %v331
        %v1357 = vpop.f32.mrb[0].mxu0
        %v1358 = vadd.f32 %v1197, %v1357
        %v1359 = vpop.f32.mrb[0].mxu0
        %v1360 = vadd.f32 %v1199, %v1359
        %1361 = vmatprep.mubr.f32.mxu0 %v344
        %1362 = vmatmul.mubr.f32.gmra.mrb[0].mxu0 %v343
        %v1363 = vpop.f32.mrb[0].mxu0
        %v1364 = vadd.f32 %v1203, %v1363
        %v1365 = vpop.f32.mrb[0].mxu0
        %v1366 = vadd.f32 %v1205, %v1365
        %1367 = vmatprep.mubr.f32.mxu0 %v356
        %1368 = vmatmul.mubr.f32.gmra.mrb[0].mxu0 %v355
        %v1369 = vpop.f32.mrb[0].mxu0
        %v1370 = vadd.f32 %v1209, %v1369
        %v1371 = vpop.f32.mrb[0].mxu0
        %v1372 = vadd.f32 %v1211, %v1371
        %1373 = vmatprep.mubr.f32.mxu0 %v368
        %1374 = vmatmul.mubr.f32.gmra.mrb[0].mxu0 %v367
        %v1375 = vpop.f32.mrb[0].mxu0
        %v1376 = vadd.f32 %v1215, %v1375
        %v1377 = vpop.f32.mrb[0].mxu0
        %v1378 = vadd.f32 %v1217, %v1377
        %1379 = vmatprep.mubr.f32.mxu0 %v380
        %1380 = vmatmul.mubr.f32.gmra.mrb[0].mxu0 %v379
        %v1381 = vpop.f32.mrb[0].mxu0
        %v1382 = vadd.f32 %v1221, %v1381
        %v1383 = vpop.f32.mrb[0].mxu0
        %v1384 = vadd.f32 %v1223, %v1383
        %1385 = vmatprep.mubr.f32.mxu0 %v392
        %1386 = vmatmul.mubr.f32.gmra.mrb[0].mxu0 %v391
        %v1387 = vpop.f32.mrb[0].mxu0
        %v1388 = vadd.f32 %v1227, %v1387
        %v1389 = vpop.f32.mrb[0].mxu0
        %v1390 = vadd.f32 %v1229, %v1389
        %1391 = vmatprep.mubr.f32.mxu0 %v404
        %1392 = vmatmul.mubr.f32.gmra.mrb[0].mxu0 %v403
        %v1393 = vpop.f32.mrb[0].mxu0
        %v1394 = vadd.f32 %v1233, %v1393
        %v1395 = vpop.f32.mrb[0].mxu0
        %v1396 = vadd.f32 %v1235, %v1395
        %1397 = vmatprep.mubr.f32.mxu0 %v416
        %1398 = vmatmul.mubr.f32.gmra.mrb[0].mxu0 %v415
        %v1399 = vpop.f32.mrb[0].mxu0
        %v1400 = vadd.f32 %v1239, %v1399
        %v1401 = vpop.f32.mrb[0].mxu0
        %v1402 = vadd.f32 %v1241, %v1401
        %1403 = vmatprep.mubr.f32.mxu0 %v428
        %1404 = vmatmul.mubr.f32.gmra.mrb[0].mxu0 %v427
        %v1405 = vpop.f32.mrb[0].mxu0
        %v1406 = vadd.f32 %v1245, %v1405
        %v1407 = vpop.f32.mrb[0].mxu0
        %v1408 = vadd.f32 %v1247, %v1407
        %1409 = vmatprep.mubr.f32.mxu0 %v440
        %1410 = vmatmul.mubr.f32.gmra.mrb[0].mxu0 %v439
        %v1411 = vpop.f32.mrb[0].mxu0
        %v1412 = vadd.f32 %v1251, %v1411
        %v1413 = vpop.f32.mrb[0].mxu0
        %v1414 = vadd.f32 %v1253, %v1413
        %1415 = vmatprep.mubr.f32.mxu0 %v452
        %1416 = vmatmul.mubr.f32.gmra.mrb[0].mxu0 %v451
        %v1417 = vpop.f32.mrb[0].mxu0
        %v1418 = vadd.f32 %v1257, %v1417
        %v1419 = vpop.f32.mrb[0].mxu0
        %v1420 = vadd.f32 %v1259, %v1419
        %1421 = vdwg.mxu0
        %1422 = vmatprep.subr.mxu0 %v466
        %1423 = vmatpush1.xpose.msra.mxu0 %v465
        %1424 = vmatprep.subr.mxu0 %v478
        %1425 = vmatpush1.xpose.msra.mxu0 %v477
        %1426 = vmatprep.subr.mxu0 %v490
        %1427 = vmatpush1.xpose.msra.mxu0 %v489
        %1428 = vmatprep.subr.mxu0 %v502
        %1429 = vmatpush1.xpose.msra.mxu0 %v501
        %1430 = vmatprep.subr.mxu0 %v514
        %1431 = vmatpush1.xpose.msra.mxu0 %v513
        %1432 = vmatprep.subr.mxu0 %v526
        %1433 = vmatpush1.xpose.msra.mxu0 %v525
        %1434 = vmatprep.subr.mxu0 %v538
        %1435 = vmatpush1.xpose.msra.mxu0 %v537
        %1436 = vmatprep.subr.mxu0 %v550
        %1437 = vmatpush1.xpose.msra.mxu0 %v549
        %1438 = vmatprep.subr.mxu0 %v562
        %1439 = vmatpush1.xpose.msra.mxu0 %v561
        %1440 = vmatprep.subr.mxu0 %v574
        %1441 = vmatpush1.xpose.msra.mxu0 %v573
        %1442 = vmatprep.subr.mxu0 %v586
        %1443 = vmatpush1.xpose.msra.mxu0 %v585
        %1444 = vmatprep.subr.mxu0 %v598
        %1445 = vmatpush1.xpose.msra.mxu0 %v597
        %1446 = vmatprep.subr.mxu0 %v610
        %1447 = vmatpush1.xpose.msra.mxu0 %v609
        %1448 = vmatprep.subr.mxu0 %v622
        %1449 = vmatpush1.xpose.msra.mxu0 %v621
        %1450 = vmatprep.subr.mxu0 %v634
        %1451 = vmatpush1.xpose.msra.mxu0 %v633
        %1452 = vmatprep.subr.mxu0 %v646
        %1453 = vmatpush1.xpose.msra.mxu0 %v645
        %1454 = vmatprep.subr.mxu0 %v658
        %1455 = vmatpush1.xpose.msra.mxu0 %v657
        %1456 = vmatprep.subr.mxu0 %v670
        %1457 = vmatpush1.xpose.msra.mxu0 %v669
        %1458 = vmatprep.subr.mxu0 %v682
        %1459 = vmatpush1.xpose.msra.mxu0 %v681
        %1460 = vmatprep.subr.mxu0 %v694
        %1461 = vmatpush1.xpose.msra.mxu0 %v693
        %1462 = vmatprep.subr.mxu0 %v706
        %1463 = vmatpush1.xpose.msra.mxu0 %v705
        %1464 = vmatprep.subr.mxu0 %v718
        %1465 = vmatpush1.xpose.msra.mxu0 %v717
        %1466 = vmatprep.subr.mxu0 %v730
        %1467 = vmatpush1.xpose.msra.mxu0 %v729
        %1468 = vmatprep.subr.mxu0 %v742
        %1469 = vmatpush1.xpose.msra.mxu0 %v741
        %1470 = vmatprep.subr.mxu0 %v754
        %1471 = vmatpush1.xpose.msra.mxu0 %v753
        %1472 = vmatprep.subr.mxu0 %v766
        %1473 = vmatpush1.xpose.msra.mxu0 %v765
        %1474 = vmatprep.subr.mxu0 %v778
        %1475 = vmatpush1.xpose.msra.mxu0 %v777
        %1476 = vmatprep.subr.mxu0 %v790
        %1477 = vmatpush1.xpose.msra.mxu0 %v789
        %1478 = vmatprep.subr.mxu0 %v802
        %1479 = vmatpush1.xpose.msra.mxu0 %v801
        %1480 = vmatprep.subr.mxu0 %v814
        %1481 = vmatpush1.xpose.msra.mxu0 %v813
        %1482 = vmatprep.subr.mxu0 %v826
        %1483 = vmatpush1.xpose.msra.mxu0 %v825
        %1484 = vmatprep.subr.mxu0 %v838
        %1485 = vmatpush1.xpose.msra.mxu0 %v837
        %1486 = vmatprep.mubr.f32.mxu0 %v274
        %1487 = vmatmul.mubr.f32.gmra.mrb[0].mxu0 %v273
        %v1488 = vpop.f32.mrb[0].mxu0
        %v1489 = vadd.f32 %v1328, %v1488
        %v1490 = vpop.f32.mrb[0].mxu0
        %v1491 = vadd.f32 %v1330, %v1490
        %1492 = vmatprep.mubr.f32.mxu0 %v286
        %1493 = vmatmul.mubr.f32.gmra.mrb[0].mxu0 %v285
        %v1494 = vpop.f32.mrb[0].mxu0
        %v1495 = vadd.f32 %v1334, %v1494
        %v1496 = vpop.f32.mrb[0].mxu0
        %v1497 = vadd.f32 %v1336, %v1496
        %1498 = vmatprep.mubr.f32.mxu0 %v298
        %1499 = vmatmul.mubr.f32.gmra.mrb[0].mxu0 %v297
        %v1500 = vpop.f32.mrb[0].mxu0
        %v1501 = vadd.f32 %v1340, %v1500
        %v1502 = vpop.f32.mrb[0].mxu0
        %v1503 = vadd.f32 %v1342, %v1502
        %1504 = vmatprep.mubr.f32.mxu0 %v310
        %1505 = vmatmul.mubr.f32.gmra.mrb[0].mxu0 %v309
        %v1506 = vpop.f32.mrb[0].mxu0
        %v1507 = vadd.f32 %v1346, %v1506
        %v1508 = vpop.f32.mrb[0].mxu0
        %v1509 = vadd.f32 %v1348, %v1508
        %1510 = vmatprep.mubr.f32.mxu0 %v322
        %1511 = vmatmul.mubr.f32.gmra.mrb[0].mxu0 %v321
        %v1512 = vpop.f32.mrb[0].mxu0
        %v1513 = vadd.f32 %v1352, %v1512
        %v1514 = vpop.f32.mrb[0].mxu0
        %v1515 = vadd.f32 %v1354, %v1514
        %1516 = vmatprep.mubr.f32.mxu0 %v334
        %1517 = vmatmul.mubr.f32.gmra.mrb[0].mxu0 %v333
        %v1518 = vpop.f32.mrb[0].mxu0
        %v1519 = vadd.f32 %v1358, %v1518
        %v1520 = vpop.f32.mrb[0].mxu0
        %v1521 = vadd.f32 %v1360, %v1520
        %1522 = vmatprep.mubr.f32.mxu0 %v346
        %1523 = vmatmul.mubr.f32.gmra.mrb[0].mxu0 %v345
        %v1524 = vpop.f32.mrb[0].mxu0
        %v1525 = vadd.f32 %v1364, %v1524
        %v1526 = vpop.f32.mrb[0].mxu0
        %v1527 = vadd.f32 %v1366, %v1526
        %1528 = vmatprep.mubr.f32.mxu0 %v358
        %1529 = vmatmul.mubr.f32.gmra.mrb[0].mxu0 %v357
        %v1530 = vpop.f32.mrb[0].mxu0
        %v1531 = vadd.f32 %v1370, %v1530
        %v1532 = vpop.f32.mrb[0].mxu0
        %v1533 = vadd.f32 %v1372, %v1532
        %1534 = vmatprep.mubr.f32.mxu0 %v370
        %1535 = vmatmul.mubr.f32.gmra.mrb[0].mxu0 %v369
        %v1536 = vpop.f32.mrb[0].mxu0
        %v1537 = vadd.f32 %v1376, %v1536
        %v1538 = vpop.f32.mrb[0].mxu0
        %v1539 = vadd.f32 %v1378, %v1538
        %1540 = vmatprep.mubr.f32.mxu0 %v382
        %1541 = vmatmul.mubr.f32.gmra.mrb[0].mxu0 %v381
        %v1542 = vpop.f32.mrb[0].mxu0
        %v1543 = vadd.f32 %v1382, %v1542
        %v1544 = vpop.f32.mrb[0].mxu0
        %v1545 = vadd.f32 %v1384, %v1544
        %1546 = vmatprep.mubr.f32.mxu0 %v394
        %1547 = vmatmul.mubr.f32.gmra.mrb[0].mxu0 %v393
        %v1548 = vpop.f32.mrb[0].mxu0
        %v1549 = vadd.f32 %v1388, %v1548
        %v1550 = vpop.f32.mrb[0].mxu0
        %v1551 = vadd.f32 %v1390, %v1550
        %1552 = vmatprep.mubr.f32.mxu0 %v406
        %1553 = vmatmul.mubr.f32.gmra.mrb[0].mxu0 %v405
        %v1554 = vpop.f32.mrb[0].mxu0
        %v1555 = vadd.f32 %v1394, %v1554
        %v1556 = vpop.f32.mrb[0].mxu0
        %v1557 = vadd.f32 %v1396, %v1556
        %1558 = vmatprep.mubr.f32.mxu0 %v418
        %1559 = vmatmul.mubr.f32.gmra.mrb[0].mxu0 %v417
        %v1560 = vpop.f32.mrb[0].mxu0
        %v1561 = vadd.f32 %v1400, %v1560
        %v1562 = vpop.f32.mrb[0].mxu0
        %v1563 = vadd.f32 %v1402, %v1562
        %1564 = vmatprep.mubr.f32.mxu0 %v430
        %1565 = vmatmul.mubr.f32.gmra.mrb[0].mxu0 %v429
        %v1566 = vpop.f32.mrb[0].mxu0
        %v1567 = vadd.f32 %v1406, %v1566
        %v1568 = vpop.f32.mrb[0].mxu0
        %v1569 = vadd.f32 %v1408, %v1568
        %1570 = vmatprep.mubr.f32.mxu0 %v442
        %1571 = vmatmul.mubr.f32.gmra.mrb[0].mxu0 %v441
        %v1572 = vpop.f32.mrb[0].mxu0
        %v1573 = vadd.f32 %v1412, %v1572
        %v1574 = vpop.f32.mrb[0].mxu0
        %v1575 = vadd.f32 %v1414, %v1574
        %1576 = vmatprep.mubr.f32.mxu0 %v454
        %1577 = vmatmul.mubr.f32.gmra.mrb[0].mxu0 %v453
        %v1578 = vpop.f32.mrb[0].mxu0
        %v1579 = vadd.f32 %v1418, %v1578
        %v1580 = vpop.f32.mrb[0].mxu0
        %v1581 = vadd.f32 %v1420, %v1580
        %1582 = vdwg.mxu0
        %1583 = vmatprep.subr.mxu0 %v468
        %1584 = vmatpush1.xpose.msra.mxu0 %v467
        %1585 = vmatprep.subr.mxu0 %v480
        %1586 = vmatpush1.xpose.msra.mxu0 %v479
        %1587 = vmatprep.subr.mxu0 %v492
        %1588 = vmatpush1.xpose.msra.mxu0 %v491
        %1589 = vmatprep.subr.mxu0 %v504
        %1590 = vmatpush1.xpose.msra.mxu0 %v503
        %1591 = vmatprep.subr.mxu0 %v516
        %1592 = vmatpush1.xpose.msra.mxu0 %v515
        %1593 = vmatprep.subr.mxu0 %v528
        %1594 = vmatpush1.xpose.msra.mxu0 %v527
        %1595 = vmatprep.subr.mxu0 %v540
        %1596 = vmatpush1.xpose.msra.mxu0 %v539
        %1597 = vmatprep.subr.mxu0 %v552
        %1598 = vmatpush1.xpose.msra.mxu0 %v551
        %1599 = vmatprep.subr.mxu0 %v564
        %1600 = vmatpush1.xpose.msra.mxu0 %v563
        %1601 = vmatprep.subr.mxu0 %v576
        %1602 = vmatpush1.xpose.msra.mxu0 %v575
        %1603 = vmatprep.subr.mxu0 %v588
        %1604 = vmatpush1.xpose.msra.mxu0 %v587
        %1605 = vmatprep.subr.mxu0 %v600
        %1606 = vmatpush1.xpose.msra.mxu0 %v599
        %1607 = vmatprep.subr.mxu0 %v612
        %1608 = vmatpush1.xpose.msra.mxu0 %v611
        %1609 = vmatprep.subr.mxu0 %v624
        %1610 = vmatpush1.xpose.msra.mxu0 %v623
        %1611 = vmatprep.subr.mxu0 %v636
        %1612 = vmatpush1.xpose.msra.mxu0 %v635
        %1613 = vmatprep.subr.mxu0 %v648
        %1614 = vmatpush1.xpose.msra.mxu0 %v647
        %1615 = vmatprep.subr.mxu0 %v660
        %1616 = vmatpush1.xpose.msra.mxu0 %v659
        %1617 = vmatprep.subr.mxu0 %v672
        %1618 = vmatpush1.xpose.msra.mxu0 %v671
        %1619 = vmatprep.subr.mxu0 %v684
        %1620 = vmatpush1.xpose.msra.mxu0 %v683
        %1621 = vmatprep.subr.mxu0 %v696
        %1622 = vmatpush1.xpose.msra.mxu0 %v695
        %1623 = vmatprep.subr.mxu0 %v708
        %1624 = vmatpush1.xpose.msra.mxu0 %v707
        %1625 = vmatprep.subr.mxu0 %v720
        %1626 = vmatpush1.xpose.msra.mxu0 %v719
        %1627 = vmatprep.subr.mxu0 %v732
        %1628 = vmatpush1.xpose.msra.mxu0 %v731
        %1629 = vmatprep.subr.mxu0 %v744
        %1630 = vmatpush1.xpose.msra.mxu0 %v743
        %1631 = vmatprep.subr.mxu0 %v756
        %1632 = vmatpush1.xpose.msra.mxu0 %v755
        %1633 = vmatprep.subr.mxu0 %v768
        %1634 = vmatpush1.xpose.msra.mxu0 %v767
        %1635 = vmatprep.subr.mxu0 %v780
        %1636 = vmatpush1.xpose.msra.mxu0 %v779
        %1637 = vmatprep.subr.mxu0 %v792
        %1638 = vmatpush1.xpose.msra.mxu0 %v791
        %1639 = vmatprep.subr.mxu0 %v804
        %1640 = vmatpush1.xpose.msra.mxu0 %v803
        %1641 = vmatprep.subr.mxu0 %v816
        %1642 = vmatpush1.xpose.msra.mxu0 %v815
        %1643 = vmatprep.subr.mxu0 %v828
        %1644 = vmatpush1.xpose.msra.mxu0 %v827
        %1645 = vmatprep.subr.mxu0 %v840
        %1646 = vmatpush1.xpose.msra.mxu0 %v839
        %1647 = vmatprep.mubr.f32.mxu0 %v276
        %1648 = vmatmul.mubr.f32.gmra.mrb[0].mxu0 %v275
        %v1649 = vpop.f32.mrb[0].mxu0
        %v1650 = vadd.f32 %v1489, %v1649
        %v1651 = vpop.f32.mrb[0].mxu0
        %v1652 = vadd.f32 %v1491, %v1651
        %1653 = vmatprep.mubr.f32.mxu0 %v288
        %1654 = vmatmul.mubr.f32.gmra.mrb[0].mxu0 %v287
        %v1655 = vpop.f32.mrb[0].mxu0
        %v1656 = vadd.f32 %v1495, %v1655
        %v1657 = vpop.f32.mrb[0].mxu0
        %v1658 = vadd.f32 %v1497, %v1657
        %1659 = vmatprep.mubr.f32.mxu0 %v300
        %1660 = vmatmul.mubr.f32.gmra.mrb[0].mxu0 %v299
        %v1661 = vpop.f32.mrb[0].mxu0
        %v1662 = vadd.f32 %v1501, %v1661
        %v1663 = vpop.f32.mrb[0].mxu0
        %v1664 = vadd.f32 %v1503, %v1663
        %1665 = vmatprep.mubr.f32.mxu0 %v312
        %1666 = vmatmul.mubr.f32.gmra.mrb[0].mxu0 %v311
        %v1667 = vpop.f32.mrb[0].mxu0
        %v1668 = vadd.f32 %v1507, %v1667
        %v1669 = vpop.f32.mrb[0].mxu0
        %v1670 = vadd.f32 %v1509, %v1669
        %1671 = vmatprep.mubr.f32.mxu0 %v324
        %1672 = vmatmul.mubr.f32.gmra.mrb[0].mxu0 %v323
        %v1673 = vpop.f32.mrb[0].mxu0
        %v1674 = vadd.f32 %v1513, %v1673
        %v1675 = vpop.f32.mrb[0].mxu0
        %v1676 = vadd.f32 %v1515, %v1675
        %1677 = vmatprep.mubr.f32.mxu0 %v336
        %1678 = vmatmul.mubr.f32.gmra.mrb[0].mxu0 %v335
        %v1679 = vpop.f32.mrb[0].mxu0
        %v1680 = vadd.f32 %v1519, %v1679
        %v1681 = vpop.f32.mrb[0].mxu0
        %v1682 = vadd.f32 %v1521, %v1681
        %1683 = vmatprep.mubr.f32.mxu0 %v348
        %1684 = vmatmul.mubr.f32.gmra.mrb[0].mxu0 %v347
        %v1685 = vpop.f32.mrb[0].mxu0
        %v1686 = vadd.f32 %v1525, %v1685
        %v1687 = vpop.f32.mrb[0].mxu0
        %v1688 = vadd.f32 %v1527, %v1687
        %1689 = vmatprep.mubr.f32.mxu0 %v360
        %1690 = vmatmul.mubr.f32.gmra.mrb[0].mxu0 %v359
        %v1691 = vpop.f32.mrb[0].mxu0
        %v1692 = vadd.f32 %v1531, %v1691
        %v1693 = vpop.f32.mrb[0].mxu0
        %v1694 = vadd.f32 %v1533, %v1693
        %1695 = vmatprep.mubr.f32.mxu0 %v372
        %1696 = vmatmul.mubr.f32.gmra.mrb[0].mxu0 %v371
        %v1697 = vpop.f32.mrb[0].mxu0
        %v1698 = vadd.f32 %v1537, %v1697
        %v1699 = vpop.f32.mrb[0].mxu0
        %v1700 = vadd.f32 %v1539, %v1699
        %1701 = vmatprep.mubr.f32.mxu0 %v384
        %1702 = vmatmul.mubr.f32.gmra.mrb[0].mxu0 %v383
        %v1703 = vpop.f32.mrb[0].mxu0
        %v1704 = vadd.f32 %v1543, %v1703
        %v1705 = vpop.f32.mrb[0].mxu0
        %v1706 = vadd.f32 %v1545, %v1705
        %1707 = vmatprep.mubr.f32.mxu0 %v396
        %1708 = vmatmul.mubr.f32.gmra.mrb[0].mxu0 %v395
        %v1709 = vpop.f32.mrb[0].mxu0
        %v1710 = vadd.f32 %v1549, %v1709
        %v1711 = vpop.f32.mrb[0].mxu0
        %v1712 = vadd.f32 %v1551, %v1711
        %1713 = vmatprep.mubr.f32.mxu0 %v408
        %1714 = vmatmul.mubr.f32.gmra.mrb[0].mxu0 %v407
        %v1715 = vpop.f32.mrb[0].mxu0
        %v1716 = vadd.f32 %v1555, %v1715
        %v1717 = vpop.f32.mrb[0].mxu0
        %v1718 = vadd.f32 %v1557, %v1717
        %1719 = vmatprep.mubr.f32.mxu0 %v420
        %1720 = vmatmul.mubr.f32.gmra.mrb[0].mxu0 %v419
        %v1721 = vpop.f32.mrb[0].mxu0
        %v1722 = vadd.f32 %v1561, %v1721
        %v1723 = vpop.f32.mrb[0].mxu0
        %v1724 = vadd.f32 %v1563, %v1723
        %1725 = vmatprep.mubr.f32.mxu0 %v432
        %1726 = vmatmul.mubr.f32.gmra.mrb[0].mxu0 %v431
        %v1727 = vpop.f32.mrb[0].mxu0
        %v1728 = vadd.f32 %v1567, %v1727
        %v1729 = vpop.f32.mrb[0].mxu0
        %v1730 = vadd.f32 %v1569, %v1729
        %1731 = vmatprep.mubr.f32.mxu0 %v444
        %1732 = vmatmul.mubr.f32.gmra.mrb[0].mxu0 %v443
        %v1733 = vpop.f32.mrb[0].mxu0
        %v1734 = vadd.f32 %v1573, %v1733
        %v1735 = vpop.f32.mrb[0].mxu0
        %v1736 = vadd.f32 %v1575, %v1735
        %1737 = vmatprep.mubr.f32.mxu0 %v456
        %1738 = vmatmul.mubr.f32.gmra.mrb[0].mxu0 %v455
        %v1739 = vpop.f32.mrb[0].mxu0
        %v1740 = vadd.f32 %v1579, %v1739
        %v1741 = vpop.f32.mrb[0].mxu0
        %v1742 = vadd.f32 %v1581, %v1741
        %1743 = vdwg.mxu0
        %1744 = vmatprep.subr.mxu0 %v470
        %1745 = vmatpush1.xpose.msra.mxu0 %v469
        %1746 = vmatprep.subr.mxu0 %v482
        %1747 = vmatpush1.xpose.msra.mxu0 %v481
        %1748 = vmatprep.subr.mxu0 %v494
        %1749 = vmatpush1.xpose.msra.mxu0 %v493
        %1750 = vmatprep.subr.mxu0 %v506
        %1751 = vmatpush1.xpose.msra.mxu0 %v505
        %1752 = vmatprep.subr.mxu0 %v518
        %1753 = vmatpush1.xpose.msra.mxu0 %v517
        %1754 = vmatprep.subr.mxu0 %v530
        %1755 = vmatpush1.xpose.msra.mxu0 %v529
        %1756 = vmatprep.subr.mxu0 %v542
        %1757 = vmatpush1.xpose.msra.mxu0 %v541
        %1758 = vmatprep.subr.mxu0 %v554
        %1759 = vmatpush1.xpose.msra.mxu0 %v553
        %1760 = vmatprep.subr.mxu0 %v566
        %1761 = vmatpush1.xpose.msra.mxu0 %v565
        %1762 = vmatprep.subr.mxu0 %v578
        %1763 = vmatpush1.xpose.msra.mxu0 %v577
        %1764 = vmatprep.subr.mxu0 %v590
        %1765 = vmatpush1.xpose.msra.mxu0 %v589
        %1766 = vmatprep.subr.mxu0 %v602
        %1767 = vmatpush1.xpose.msra.mxu0 %v601
        %1768 = vmatprep.subr.mxu0 %v614
        %1769 = vmatpush1.xpose.msra.mxu0 %v613
        %1770 = vmatprep.subr.mxu0 %v626
        %1771 = vmatpush1.xpose.msra.mxu0 %v625
        %1772 = vmatprep.subr.mxu0 %v638
        %1773 = vmatpush1.xpose.msra.mxu0 %v637
        %1774 = vmatprep.subr.mxu0 %v650
        %1775 = vmatpush1.xpose.msra.mxu0 %v649
        %1776 = vmatprep.subr.mxu0 %v662
        %1777 = vmatpush1.xpose.msra.mxu0 %v661
        %1778 = vmatprep.subr.mxu0 %v674
        %1779 = vmatpush1.xpose.msra.mxu0 %v673
        %1780 = vmatprep.subr.mxu0 %v686
        %1781 = vmatpush1.xpose.msra.mxu0 %v685
        %1782 = vmatprep.subr.mxu0 %v698
        %1783 = vmatpush1.xpose.msra.mxu0 %v697
        %1784 = vmatprep.subr.mxu0 %v710
        %1785 = vmatpush1.xpose.msra.mxu0 %v709
        %1786 = vmatprep.subr.mxu0 %v722
        %1787 = vmatpush1.xpose.msra.mxu0 %v721
        %1788 = vmatprep.subr.mxu0 %v734
        %1789 = vmatpush1.xpose.msra.mxu0 %v733
        %1790 = vmatprep.subr.mxu0 %v746
        %1791 = vmatpush1.xpose.msra.mxu0 %v745
        %1792 = vmatprep.subr.mxu0 %v758
        %1793 = vmatpush1.xpose.msra.mxu0 %v757
        %1794 = vmatprep.subr.mxu0 %v770
        %1795 = vmatpush1.xpose.msra.mxu0 %v769
        %1796 = vmatprep.subr.mxu0 %v782
        %1797 = vmatpush1.xpose.msra.mxu0 %v781
        %1798 = vmatprep.subr.mxu0 %v794
        %1799 = vmatpush1.xpose.msra.mxu0 %v793
        %1800 = vmatprep.subr.mxu0 %v806
        %1801 = vmatpush1.xpose.msra.mxu0 %v805
        %1802 = vmatprep.subr.mxu0 %v818
        %1803 = vmatpush1.xpose.msra.mxu0 %v817
        %1804 = vmatprep.subr.mxu0 %v830
        %1805 = vmatpush1.xpose.msra.mxu0 %v829
        %1806 = vmatprep.subr.mxu0 %v842
        %1807 = vmatpush1.xpose.msra.mxu0 %v841
        %1808 = vmatprep.mubr.f32.mxu0 %v278
        %1809 = vmatmul.mubr.f32.gmra.mrb[0].mxu0 %v277
        %v1810 = vpop.f32.mrb[0].mxu0
        %v1811 = vadd.f32 %v1650, %v1810
        %v1812 = vpop.f32.mrb[0].mxu0
        %v1813 = vadd.f32 %v1652, %v1812
        %1814 = vmatprep.mubr.f32.mxu0 %v290
        %1815 = vmatmul.mubr.f32.gmra.mrb[0].mxu0 %v289
        %v1816 = vpop.f32.mrb[0].mxu0
        %v1817 = vadd.f32 %v1656, %v1816
        %v1818 = vpop.f32.mrb[0].mxu0
        %v1819 = vadd.f32 %v1658, %v1818
        %1820 = vmatprep.mubr.f32.mxu0 %v302
        %1821 = vmatmul.mubr.f32.gmra.mrb[0].mxu0 %v301
        %v1822 = vpop.f32.mrb[0].mxu0
        %v1823 = vadd.f32 %v1662, %v1822
        %v1824 = vpop.f32.mrb[0].mxu0
        %v1825 = vadd.f32 %v1664, %v1824
        %1826 = vmatprep.mubr.f32.mxu0 %v314
        %1827 = vmatmul.mubr.f32.gmra.mrb[0].mxu0 %v313
        %v1828 = vpop.f32.mrb[0].mxu0
        %v1829 = vadd.f32 %v1668, %v1828
        %v1830 = vpop.f32.mrb[0].mxu0
        %v1831 = vadd.f32 %v1670, %v1830
        %1832 = vmatprep.mubr.f32.mxu0 %v326
        %1833 = vmatmul.mubr.f32.gmra.mrb[0].mxu0 %v325
        %v1834 = vpop.f32.mrb[0].mxu0
        %v1835 = vadd.f32 %v1674, %v1834
        %v1836 = vpop.f32.mrb[0].mxu0
        %v1837 = vadd.f32 %v1676, %v1836
        %1838 = vmatprep.mubr.f32.mxu0 %v338
        %1839 = vmatmul.mubr.f32.gmra.mrb[0].mxu0 %v337
        %v1840 = vpop.f32.mrb[0].mxu0
        %v1841 = vadd.f32 %v1680, %v1840
        %v1842 = vpop.f32.mrb[0].mxu0
        %v1843 = vadd.f32 %v1682, %v1842
        %1844 = vmatprep.mubr.f32.mxu0 %v350
        %1845 = vmatmul.mubr.f32.gmra.mrb[0].mxu0 %v349
        %v1846 = vpop.f32.mrb[0].mxu0
        %v1847 = vadd.f32 %v1686, %v1846
        %v1848 = vpop.f32.mrb[0].mxu0
        %v1849 = vadd.f32 %v1688, %v1848
        %1850 = vmatprep.mubr.f32.mxu0 %v362
        %1851 = vmatmul.mubr.f32.gmra.mrb[0].mxu0 %v361
        %v1852 = vpop.f32.mrb[0].mxu0
        %v1853 = vadd.f32 %v1692, %v1852
        %v1854 = vpop.f32.mrb[0].mxu0
        %v1855 = vadd.f32 %v1694, %v1854
        %1856 = vmatprep.mubr.f32.mxu0 %v374
        %1857 = vmatmul.mubr.f32.gmra.mrb[0].mxu0 %v373
        %v1858 = vpop.f32.mrb[0].mxu0
        %v1859 = vadd.f32 %v1698, %v1858
        %v1860 = vpop.f32.mrb[0].mxu0
        %v1861 = vadd.f32 %v1700, %v1860
        %1862 = vmatprep.mubr.f32.mxu0 %v386
        %1863 = vmatmul.mubr.f32.gmra.mrb[0].mxu0 %v385
        %v1864 = vpop.f32.mrb[0].mxu0
        %v1865 = vadd.f32 %v1704, %v1864
        %v1866 = vpop.f32.mrb[0].mxu0
        %v1867 = vadd.f32 %v1706, %v1866
        %1868 = vmatprep.mubr.f32.mxu0 %v398
        %1869 = vmatmul.mubr.f32.gmra.mrb[0].mxu0 %v397
        %v1870 = vpop.f32.mrb[0].mxu0
        %v1871 = vadd.f32 %v1710, %v1870
        %v1872 = vpop.f32.mrb[0].mxu0
        %v1873 = vadd.f32 %v1712, %v1872
        %1874 = vmatprep.mubr.f32.mxu0 %v410
        %1875 = vmatmul.mubr.f32.gmra.mrb[0].mxu0 %v409
        %v1876 = vpop.f32.mrb[0].mxu0
        %v1877 = vadd.f32 %v1716, %v1876
        %v1878 = vpop.f32.mrb[0].mxu0
        %v1879 = vadd.f32 %v1718, %v1878
        %1880 = vmatprep.mubr.f32.mxu0 %v422
        %1881 = vmatmul.mubr.f32.gmra.mrb[0].mxu0 %v421
        %v1882 = vpop.f32.mrb[0].mxu0
        %v1883 = vadd.f32 %v1722, %v1882
        %v1884 = vpop.f32.mrb[0].mxu0
        %v1885 = vadd.f32 %v1724, %v1884
        %1886 = vmatprep.mubr.f32.mxu0 %v434
        %1887 = vmatmul.mubr.f32.gmra.mrb[0].mxu0 %v433
        %v1888 = vpop.f32.mrb[0].mxu0
        %v1889 = vadd.f32 %v1728, %v1888
        %v1890 = vpop.f32.mrb[0].mxu0
        %v1891 = vadd.f32 %v1730, %v1890
        %1892 = vmatprep.mubr.f32.mxu0 %v446
        %1893 = vmatmul.mubr.f32.gmra.mrb[0].mxu0 %v445
        %v1894 = vpop.f32.mrb[0].mxu0
        %v1895 = vadd.f32 %v1734, %v1894
        %v1896 = vpop.f32.mrb[0].mxu0
        %v1897 = vadd.f32 %v1736, %v1896
        %1898 = vmatprep.mubr.f32.mxu0 %v458
        %1899 = vmatmul.mubr.f32.gmra.mrb[0].mxu0 %v457
        %v1900 = vpop.f32.mrb[0].mxu0
        %v1901 = vadd.f32 %v1740, %v1900
        %v1902 = vpop.f32.mrb[0].mxu0
        %v1903 = vadd.f32 %v1742, %v1902
        %1904 = vdwg.mxu0
        %1905 = vst [vmem:[%s256] sm:$0xff] %v1811
        %1906 = vst [vmem:[%s256 + $0x8] sm:$0xff] %v1813
        %1907 = vst [vmem:[%s256 + $0x10] sm:$0xff] %v1817
        %1908 = vst [vmem:[%s256 + $0x18] sm:$0xff] %v1819
        %1909 = vst [vmem:[%s256 + $0x20] sm:$0xff] %v1823
        %1910 = vst [vmem:[%s256 + $0x28] sm:$0xff] %v1825
        %1911 = vst [vmem:[%s256 + $0x30] sm:$0xff] %v1829
        %1912 = vst [vmem:[%s256 + $0x38] sm:$0xff] %v1831
        %1913 = vst [vmem:[%s256 + $0x40] sm:$0xff] %v1835
        %1914 = vst [vmem:[%s256 + $0x48] sm:$0xff] %v1837
        %1915 = vst [vmem:[%s256 + $0x50] sm:$0xff] %v1841
        %1916 = vst [vmem:[%s256 + $0x58] sm:$0xff] %v1843
        %1917 = vst [vmem:[%s256 + $0x60] sm:$0xff] %v1847
        %1918 = vst [vmem:[%s256 + $0x68] sm:$0xff] %v1849
        %1919 = vst [vmem:[%s256 + $0x70] sm:$0xff] %v1853
        %1920 = vst [vmem:[%s256 + $0x78] sm:$0xff] %v1855
        %1921 = vst [vmem:[%s256 + $0x80] sm:$0xff] %v1859
        %1922 = vst [vmem:[%s256 + $0x88] sm:$0xff] %v1861
        %1923 = vst [vmem:[%s256 + $0x90] sm:$0xff] %v1865
        %1924 = vst [vmem:[%s256 + $0x98] sm:$0xff] %v1867
        %1925 = vst [vmem:[%s256 + $0xa0] sm:$0xff] %v1871
        %1926 = vst [vmem:[%s256 + $0xa8] sm:$0xff] %v1873
        %1927 = vst [vmem:[%s256 + $0xb0] sm:$0xff] %v1877
        %1928 = vst [vmem:[%s256 + $0xb8] sm:$0xff] %v1879
        %1929 = vst [vmem:[%s256 + $0xc0] sm:$0xff] %v1883
        %1930 = vst [vmem:[%s256 + $0xc8] sm:$0xff] %v1885
        %1931 = vst [vmem:[%s256 + $0xd0] sm:$0xff] %v1889
        %1932 = vst [vmem:[%s256 + $0xd8] sm:$0xff] %v1891
        %1933 = vst [vmem:[%s256 + $0xe0] sm:$0xff] %v1895
        %1934 = vst [vmem:[%s256 + $0xe8] sm:$0xff] %v1897
        %1935 = vst [vmem:[%s256 + $0xf0] sm:$0xff] %v1901
        %1936 = vst [vmem:[%s256 + $0xf8] sm:$0xff] %v1903
        %s1937 = sand.u32 %s132, 1
        %s1938 = scalar_lea.sflag [#allocation4], %s1937
        %s1939 = sand.u32 %s132, 1
        %s1940 = smul.addr %s1939, 256
        %s1941 = scalar_lea.vmem [#allocation7], %s1940
        // Predicated region
        $region41: #{tpu_custom_call.1} parent=31 // pred_check
          %p1942 = pneg %p142
        $region42: #{tpu_custom_call.1} parent=31 // pred_check_branch
          %1944 = sbr.rel (%p1942) target = $region44
        $region43: #{tpu_custom_call.1} parent=31 // pred_region
          %s1945 = smul.u32 16, %s28
          %s1946 = smul.u32 2, %s27
          %s1948 = ssub.s32 4096, 4096
          %1949 = vsyncadd %s1938, %s1948
          %s1950 = smul.addr %s1945, 2
          %s1951 = sadd.s32 %s1946, %s1950
          %s1952 = smul.addr %s26, 96
          %s1953 = sadd.s32 %s1951, %s1952
          %s1954 = smul.addr %s1953, 128
          %s1955 = scalar_lea.hbm %s3, %s1954
          %s1956 = sshll.u32 %s1941, 4
          %s1957 = int_to_ptr.vmem [resolvable:$true] %s1956
          %1962 = dma.vmem_to_hbm [thread:$0]  %s1957, 4096, %s1955, %s1938, 256, 256, 16
        $region44: #{tpu_custom_call.1} parent=31 // pred_fallthru
          _
      $region32: #{tpu_custom_call.1} parent=5 // pred_fallthru
        _
      %p1963 = scmp.le.s32.totalorder 2, %s16
      // Predicated region
      $region45: #{tpu_custom_call.1} parent=5 // pred_check
        %p1964 = pneg %p1963
      $region46: #{tpu_custom_call.1} parent=5 // pred_check_branch
        %1966 = sbr.rel (%p1964) target = $region48
      $region47: #{tpu_custom_call.1} parent=5 // pred_region
        %s1967 = ssub.s32 %s16, 2
        // Predicated region
        $region49: #{tpu_custom_call.1} parent=47 // pred_check
          %p1968 = pneg %p148
        $region50: #{tpu_custom_call.1} parent=47 // pred_check_branch
          %1970 = sbr.rel (%p1968) target = $region52
        $region51: #{tpu_custom_call.1} parent=47 // pred_region
          %s1971 = sand.u32 %s133, 1
          %s1972 = scalar_lea.sflag [#allocation4], %s1971
          %s1973 = sand.u32 %s133, 1
          %s1974 = smul.addr %s1973, 256
          %s1975 = scalar_lea.vmem [#allocation7], %s1974
          %1976 = dma.done %s1972, 4096
        $region52: #{tpu_custom_call.1} parent=47 // pred_fallthru
          _
      $region48: #{tpu_custom_call.1} parent=5 // pred_fallthru
        _
    $region6: #{tpu_custom_call.1} parent=1 // loop_footer
      %s20 = sadd.s32 1, %s16
    $region7: #{tpu_custom_call.1} parent=1 // loop_footer_branch
      %15 = sbr.rel target = $region3
    $region8: #{tpu_custom_call.1} parent=1 // loop_exit
      _
    %1977 = vsyncpa [#allocation3], 1
    %s1978 = scalar_lea.sflag [#allocation3], 1
    %1979 = vsyncpa %s1978, 1
    %1980 = vsyncpa [#allocation6], 1
    %s1981 = scalar_lea.sflag [#allocation6], 1
    %1982 = vsyncpa %s1981, 1
    %1983 = vsyncpa [#allocation4], 1
    %s1984 = scalar_lea.sflag [#allocation4], 1
    %1985 = vsyncpa %s1984, 1

</llo_original>
